<compile_context>
chip_gen: v5e
topology: v5e:2x2
jax: 0.10.0
libtpu: 0.0.40
codegen_flags: <defaults>
</compile_context>

<pallas_src>
import jax
import jax.numpy as jnp
from jax import lax
from jax.experimental import pallas as pl
from jax.experimental.pallas import tpu as pltpu


def _round_up(n, m):
    return ((n + m - 1) // m) * m


def _mlp_kernel(x_ref, w1_ref, b1_ref, w2_ref, b2_ref, w3_ref, b3_ref, o_ref):
    # x tile: [tb, 15] f32 straight from HBM; cast to bf16 in-kernel (avoids a
    # separate XLA cast pass that would double HBM traffic on x).
    xb = x_ref[...].astype(jnp.bfloat16)

    # Layer 1: Linear(15 -> 32) + ReLU   (bf16 MXU matmul, f32 accumulate)
    h1 = jnp.dot(xb, w1_ref[...], preferred_element_type=jnp.float32)
    h1 = jnp.maximum(h1 + b1_ref[...], 0.0)

    # Layer 2: Linear(32 -> 16) + ReLU
    h2 = jnp.dot(h1.astype(jnp.bfloat16), w2_ref[...],
                 preferred_element_type=jnp.float32)
    h2 = jnp.maximum(h2 + b2_ref[...], 0.0)

    # Layer 3: Linear(16 -> 1) on the MXU -> per-row logits, [tb, 1].
    logits = jnp.dot(h2.astype(jnp.bfloat16), w3_ref[...],
                     preferred_element_type=jnp.float32)

    # Relayout [tb, 1] (one value per sublane-row) -> [tb//128, 128]
    # (lane dense) BEFORE bias/exp/reciprocal.  dense[q, l] = logits[128q + l]
    # is computed with a diagonal select + sum over the sublane axis; these are
    # ordinary VPU ops that overlap the MXU work and avoid relying on a
    # sublane<->lane reshape.
    R = o_ref.shape[0]                       # tb // 128 (static)
    logits3 = logits.reshape(R, 128, 1)      # split rows; minor dim unchanged
    m_idx = lax.broadcasted_iota(jnp.int32, (1, 128, 128), 1)
    l_idx = lax.broadcasted_iota(jnp.int32, (1, 128, 128), 2)
    # Use where (not multiply): garbage rows of a ragged edge tile may hold
    # NaNs, and NaN * 0 would pollute valid lanes of the same output row.
    dense = jnp.sum(jnp.where(m_idx == l_idx, logits3, 0.0), axis=1)  # [R,128]

    # Sigmoid on the lane-dense logits (8 vregs per 8192 rows, not 1024).
    z = dense + b3_ref[...]
    o_ref[...] = pl.reciprocal(1.0 + jnp.exp(-z),
                               approx=False).astype(o_ref.dtype)


def doppler_classifier(x, params, *, block_b=8192):
    """x: [B, 15] float32. params: dict of transposed weights / biases."""
    B = x.shape[0]

    # Batch tile: multiple of 1024 so (a) the bf16 x block obeys the (16,128)
    # sublane rule and (b) the lane-dense output block (tb//128, 128) has a
    # sublane-aligned second-minor dim.  8192 rows keeps per-tile VMEM
    # (double-buffered x + f32 intermediates + relayout temporaries, ~25-35
    # MiB) inside the 48 MiB limit requested below on every generation
    # (v7x: 64 MiB physical).  Sweep block_b 4096-16384 when profiling.
    tb = min(block_b, _round_up(B, 1024))
    # v7x megacore: if there is enough work, ensure >= 2 tiles so
    # dimension_semantics=("parallel",) can spread them over both TensorCores.
    if B > 2048 and pl.cdiv(B, tb) < 2:
        tb = _round_up((B + 1) // 2, 1024)
    num_tiles = pl.cdiv(B, tb)

    out_rows = pl.cdiv(B, 128)   # lane-dense output: 128 batch rows per line

    # Weights are tiny and stay resident in VMEM (constant index maps).
    w1 = params["w1"].astype(jnp.bfloat16)   # [15, 32]
    w2 = params["w2"].astype(jnp.bfloat16)   # [32, 16]
    w3 = params["w3"].astype(jnp.bfloat16)   # [16, 1]
    b1 = params["b1"].astype(jnp.float32)    # [1, 32]
    b2 = params["b2"].astype(jnp.float32)    # [1, 16]
    b3 = params["b3"].astype(jnp.float32)    # [1, 1]

    def const(a):
        return pl.BlockSpec(a.shape, lambda i: tuple(0 for _ in a.shape))

    out = pl.pallas_call(
        _mlp_kernel,
        out_shape=jax.ShapeDtypeStruct((out_rows, 128), jnp.float32),
        grid=(num_tiles,),
        in_specs=[
            pl.BlockSpec((tb, 15), lambda i: (i, 0)),   # x: tiled over batch
            const(w1), const(b1),
            const(w2), const(b2),
            const(w3), const(b3),
        ],
        out_specs=pl.BlockSpec((tb // 128, 128), lambda i: (i, 0)),
        compiler_params=pltpu.CompilerParams(
            dimension_semantics=("parallel",),
            vmem_limit_bytes=48 * 1024 * 1024),
    )(x.astype(jnp.float32), w1, b1, w2, b2, w3, b3)

    # Undo the lane-dense packing: row-major (out_rows, 128) -> (B, 1).
    return out.reshape(-1, 1)[:B]


def init_params(key):
    """Deterministic init mirroring nn.Linear shapes (stored transposed)."""
    k1, k2, k3, k4, k5, k6 = jax.random.split(key, 6)

    def uniform(k, shape, fan_in):
        bound = 1.0 / jnp.sqrt(fan_in)
        return jax.random.uniform(k, shape, jnp.float32, -bound, bound)

    return {
        # fc1: Linear(15, 32)  -> W^T: [15, 32], b: [1, 32]
        "w1": uniform(k1, (15, 32), 15.0),
        "b1": uniform(k2, (1, 32), 15.0),
        # fc2: Linear(32, 16)  -> W^T: [32, 16], b: [1, 16]
        "w2": uniform(k3, (32, 16), 32.0),
        "b2": uniform(k4, (1, 16), 32.0),
        # out: Linear(16, 1)   -> W^T: [16, 1], b: [1, 1]
        "w3": uniform(k5, (16, 1), 16.0),
        "b3": uniform(k6, (1, 1), 16.0),
    }


def _reference(x, p):
    h1 = jnp.maximum(x @ p["w1"] + p["b1"], 0.0)
    h2 = jnp.maximum(h1 @ p["w2"] + p["b2"], 0.0)
    return jax.nn.sigmoid(h2 @ p["w3"] + p["b3"])


if __name__ == "__main__":
    key = jax.random.PRNGKey(0)
    kx, kp = jax.random.split(key)

    B = 200  # deliberately ragged (not a multiple of 128/1024)
    x = jax.random.normal(kx, (B, 15), dtype=jnp.float32)
    params = init_params(kp)

    out = doppler_classifier(x, params)
    out = jax.block_until_ready(out)

    ref = _reference(x, params)
    assert out.shape == (B, 1)
    # bf16 x/weights on the MXU path -> compare against the f32 reference with
    # a correspondingly relaxed tolerance.
    assert jnp.allclose(out, ref, atol=2e-2, rtol=2e-2), (
        float(jnp.max(jnp.abs(out - ref))))

    print("KERNEL_OK")
</pallas_src>

<mosaic_0001>
module attributes {stable_mosaic.version = 11 : i64} {
  func.func @_mlp_kernel(%arg0: i32, %arg1: memref<1024x15xf32, #tpu.memory_space<vmem>>, %arg2: memref<15x32xbf16, #tpu.memory_space<vmem>>, %arg3: memref<1x32xf32, #tpu.memory_space<vmem>>, %arg4: memref<32x16xbf16, #tpu.memory_space<vmem>>, %arg5: memref<1x16xf32, #tpu.memory_space<vmem>>, %arg6: memref<16x1xbf16, #tpu.memory_space<vmem>>, %arg7: memref<1x1xf32, #tpu.memory_space<vmem>>, %arg8: memref<8x128xf32, #tpu.memory_space<vmem>>) attributes {dimension_semantics = [#tpu.dimension_semantics<parallel>], iteration_bounds = array<i64: 1>, scalar_prefetch = 0 : i64, scratch_operands = 0 : i64, tpu.core_type = #tpu.core_type<tc>, window_params = [{transform_indices = @transform_0, window_bounds = array<i64: 1024, 15>}, {pipeline_mode = #tpu.pipeline_mode<synchronous>, transform_indices = @transform_1, window_bounds = array<i64: 15, 32>}, {pipeline_mode = #tpu.pipeline_mode<synchronous>, transform_indices = @transform_2, window_bounds = array<i64: 1, 32>}, {pipeline_mode = #tpu.pipeline_mode<synchronous>, transform_indices = @transform_3, window_bounds = array<i64: 32, 16>}, {pipeline_mode = #tpu.pipeline_mode<synchronous>, transform_indices = @transform_4, window_bounds = array<i64: 1, 16>}, {pipeline_mode = #tpu.pipeline_mode<synchronous>, transform_indices = @transform_5, window_bounds = array<i64: 16, 1>}, {pipeline_mode = #tpu.pipeline_mode<synchronous>, transform_indices = @transform_6, window_bounds = array<i64: 1, 1>}, {transform_indices = @transform_7, window_bounds = array<i64: 8, 128>}]} {
    %c0 = arith.constant 0 : index
    %c0_0 = arith.constant 0 : index
    %0 = vector.load %arg1[%c0, %c0_0] : memref<1024x15xf32, #tpu.memory_space<vmem>>, vector<1024x15xf32>
    %1 = arith.truncf %0 : vector<1024x15xf32> to vector<1024x15xbf16>
    %c0_1 = arith.constant 0 : index
    %c0_2 = arith.constant 0 : index
    %2 = vector.load %arg2[%c0_1, %c0_2] : memref<15x32xbf16, #tpu.memory_space<vmem>>, vector<15x32xbf16>
    %cst = arith.constant dense<0.000000e+00> : vector<1024x32xf32>
    %3 = tpu.matmul %1, %2, %cst {dimension_numbers = #tpu.dot_dimension_numbers<[1], [0], [0], [1], [0, 0, 1, 1], [], []>} : vector<1024x15xbf16>, vector<15x32xbf16>, vector<1024x32xf32> -> vector<1024x32xf32>
    %c0_3 = arith.constant 0 : index
    %c0_4 = arith.constant 0 : index
    %4 = vector.load %arg3[%c0_3, %c0_4] : memref<1x32xf32, #tpu.memory_space<vmem>>, vector<1x32xf32>
    %5 = vector.broadcast %4 : vector<1x32xf32> to vector<1024x32xf32>
    %6 = arith.addf %3, %5 : vector<1024x32xf32>
    %cst_5 = arith.constant 0.000000e+00 : f32
    %7 = vector.broadcast %cst_5 : f32 to vector<1024x32xf32>
    %8 = arith.maximumf %6, %7 : vector<1024x32xf32>
    %9 = arith.truncf %8 : vector<1024x32xf32> to vector<1024x32xbf16>
    %c0_6 = arith.constant 0 : index
    %c0_7 = arith.constant 0 : index
    %10 = vector.load %arg4[%c0_6, %c0_7] : memref<32x16xbf16, #tpu.memory_space<vmem>>, vector<32x16xbf16>
    %cst_8 = arith.constant dense<0.000000e+00> : vector<1024x16xf32>
    %11 = tpu.matmul %9, %10, %cst_8 {dimension_numbers = #tpu.dot_dimension_numbers<[1], [0], [0], [1], [0, 0, 1, 1], [], []>} : vector<1024x32xbf16>, vector<32x16xbf16>, vector<1024x16xf32> -> vector<1024x16xf32>
    %c0_9 = arith.constant 0 : index
    %c0_10 = arith.constant 0 : index
    %12 = vector.load %arg5[%c0_9, %c0_10] : memref<1x16xf32, #tpu.memory_space<vmem>>, vector<1x16xf32>
    %13 = vector.broadcast %12 : vector<1x16xf32> to vector<1024x16xf32>
    %14 = arith.addf %11, %13 : vector<1024x16xf32>
    %cst_11 = arith.constant 0.000000e+00 : f32
    %15 = vector.broadcast %cst_11 : f32 to vector<1024x16xf32>
    %16 = arith.maximumf %14, %15 : vector<1024x16xf32>
    %17 = arith.truncf %16 : vector<1024x16xf32> to vector<1024x16xbf16>
    %c0_12 = arith.constant 0 : index
    %c0_13 = arith.constant 0 : index
    %18 = vector.load %arg6[%c0_12, %c0_13] : memref<16x1xbf16, #tpu.memory_space<vmem>>, vector<16x1xbf16>
    %cst_14 = arith.constant dense<0.000000e+00> : vector<1024x1xf32>
    %19 = tpu.matmul %17, %18, %cst_14 {dimension_numbers = #tpu.dot_dimension_numbers<[1], [0], [0], [1], [0, 0, 1, 1], [], []>} : vector<1024x16xbf16>, vector<16x1xbf16>, vector<1024x1xf32> -> vector<1024x1xf32>
    %20 = vector.shape_cast %19 : vector<1024x1xf32> to vector<8x128x1xf32>
    %21 = tpu.iota {dimensions = array<i32: 1>} : vector<1x128x128xi32>
    %22 = tpu.iota {dimensions = array<i32: 2>} : vector<1x128x128xi32>
    %23 = arith.cmpi eq, %21, %22 : vector<1x128x128xi32>
    %cst_15 = arith.constant 0.000000e+00 : f32
    %24 = vector.shape_cast %23 : vector<1x128x128xi1> to vector<1x128x128xi1>
    %25 = vector.broadcast %24 : vector<1x128x128xi1> to vector<8x128x128xi1>
    %26 = vector.shape_cast %20 : vector<8x128x1xf32> to vector<8x128x1xf32>
    %27 = vector.broadcast %26 : vector<8x128x1xf32> to vector<8x128x128xf32>
    %28 = vector.broadcast %cst_15 : f32 to vector<8x128x128xf32>
    %29 = arith.select %25, %27, %28 : vector<8x128x128xi1>, vector<8x128x128xf32>
    %cst_16 = arith.constant dense<0.000000e+00> : vector<8x128xf32>
    %30 = vector.multi_reduction <add>, %29, %cst_16 [1] : vector<8x128x128xf32> to vector<8x128xf32>
    %c0_17 = arith.constant 0 : index
    %c0_18 = arith.constant 0 : index
    %31 = vector.load %arg7[%c0_17, %c0_18] : memref<1x1xf32, #tpu.memory_space<vmem>>, vector<1x1xf32>
    %32 = vector.broadcast %31 : vector<1x1xf32> to vector<8x128xf32>
    %33 = arith.addf %30, %32 : vector<8x128xf32>
    %cst_19 = arith.constant 0.000000e+00 : f32
    %34 = vector.broadcast %cst_19 : f32 to vector<8x128xf32>
    %35 = arith.subf %34, %33 : vector<8x128xf32>
    %36 = math.exp %35 : vector<8x128xf32>
    %cst_20 = arith.constant 1.000000e+00 : f32
    %37 = vector.broadcast %cst_20 : f32 to vector<8x128xf32>
    %38 = arith.addf %37, %36 : vector<8x128xf32>
    %39 = tpu.reciprocal %38 : vector<8x128xf32> -> vector<8x128xf32>
    %c0_21 = arith.constant 0 : index
    %c0_22 = arith.constant 0 : index
    %40 = vector.load %arg8[%c0_21, %c0_22] : memref<8x128xf32, #tpu.memory_space<vmem>>, vector<8x128xf32>
    tpu.vector_store %arg8[%c0_21, %c0_22], %39 {strides = array<i32>} : memref<8x128xf32, #tpu.memory_space<vmem>>, vector<8x128xf32>,
    return
  }
  func.func @transform_0(%arg0: i32) -> (i32, i32) {
    %c0_i32 = arith.constant 0 : i32
    %c0_i32_0 = arith.constant 0 : i32
    return %arg0, %c0_i32 : i32, i32
  }
  func.func @transform_1(%arg0: i32) -> (i32, i32) {
    %c0_i32 = arith.constant 0 : i32
    %c0_i32_0 = arith.constant 0 : i32
    %c0_i32_1 = arith.constant 0 : i32
    return %c0_i32, %c0_i32_0 : i32, i32
  }
  func.func @transform_2(%arg0: i32) -> (i32, i32) {
    %c0_i32 = arith.constant 0 : i32
    %c0_i32_0 = arith.constant 0 : i32
    %c0_i32_1 = arith.constant 0 : i32
    return %c0_i32, %c0_i32_0 : i32, i32
  }
  func.func @transform_3(%arg0: i32) -> (i32, i32) {
    %c0_i32 = arith.constant 0 : i32
    %c0_i32_0 = arith.constant 0 : i32
    %c0_i32_1 = arith.constant 0 : i32
    return %c0_i32, %c0_i32_0 : i32, i32
  }
  func.func @transform_4(%arg0: i32) -> (i32, i32) {
    %c0_i32 = arith.constant 0 : i32
    %c0_i32_0 = arith.constant 0 : i32
    %c0_i32_1 = arith.constant 0 : i32
    return %c0_i32, %c0_i32_0 : i32, i32
  }
  func.func @transform_5(%arg0: i32) -> (i32, i32) {
    %c0_i32 = arith.constant 0 : i32
    %c0_i32_0 = arith.constant 0 : i32
    %c0_i32_1 = arith.constant 0 : i32
    return %c0_i32, %c0_i32_0 : i32, i32
  }
  func.func @transform_6(%arg0: i32) -> (i32, i32) {
    %c0_i32 = arith.constant 0 : i32
    %c0_i32_0 = arith.constant 0 : i32
    %c0_i32_1 = arith.constant 0 : i32
    return %c0_i32, %c0_i32_0 : i32, i32
  }
  func.func @transform_7(%arg0: i32) -> (i32, i32) {
    %c0_i32 = arith.constant 0 : i32
    %c0_i32_0 = arith.constant 0 : i32
    return %arg0, %c0_i32 : i32, i32
  }
}

</mosaic_0001>

<llo_original>
// kernel: tpu_custom_call.1
$region0: #{tpu_custom_call.1}
  #allocation0 [shape = 'u32[]', space=smem, size = 0x4, offset = 0x4, fixed_abs, tag = 'smem constant byte address 0x4 - core index']
  #allocation1 [shape = 'u32[72,128]{1,0:T(1,128)}', space=vmem, size = 0x9000, scoped, tag = 'internal scratch']
  #allocation2 [shape = 'f32[1,1]{1,0:T(1,128)S(1)}', space=vmem, size = 0x200, scoped, tag = 'scoped memory for tpu_custom_call.1']
  %s0 = inlined_call_operand.vmem [shape: f32[200,15], index: 0, kind: input, shape index: {}]
  %s1 = inlined_call_operand.vmem [shape: bf16[15,32], index: 1, kind: input, shape index: {}]
  %s2 = inlined_call_operand.vmem [shape: f32[1,32], index: 2, kind: input, shape index: {}]
  %s3 = inlined_call_operand.vmem [shape: bf16[32,16], index: 3, kind: input, shape index: {}]
  %s4 = inlined_call_operand.vmem [shape: f32[1,16], index: 4, kind: input, shape index: {}]
  %s5 = inlined_call_operand.vmem [shape: bf16[16,1], index: 5, kind: input, shape index: {}]
  %s6 = inlined_call_operand.<no memory space> [shape: f32[1,1], index: 6, kind: input, shape index: {}]
  %s7 = inlined_call_operand.hbm [shape: f32[2,128], index: 7, kind: output, shape index: {}]
  %s8 = sld [smem:[#allocation0]]
  $region38: #{tpu_custom_call.1} parent=0
    _
  %s10 = ssub.s32 1, %s8
  %s11 = scalar_select 0, %s10, %s8
  %v12 = vstv %s6
  %13 = vst [vmem:[#allocation2] sm:$0x1] %v12
  $region1: #{tpu_custom_call.1} parent=0
    #allocation3 [shape = 'u8[4096]{0}', space=vmem, size = 0x1000, scoped, tag = 'output window, operand 0, single buffered']
    #allocation4 [shape = 's32[1]{0}', space=sflag, size = 0x4, scoped, tag = 'scoped memory for tpu_custom_call.1']
    %14 = vsyncpa [#allocation4], 0
    // Predicated region
    $region2: #{tpu_custom_call.1} parent=1 // pred_check
      _
    $region3: #{tpu_custom_call.1} parent=1 // pred_check_branch
      %16 = sbr.rel (0) target = $region5
    $region4: #{tpu_custom_call.1} parent=1 // pred_region
      _
    $region5: #{tpu_custom_call.1} parent=1 // pred_fallthru
      _
    // Predicated region
    $region6: #{tpu_custom_call.1} parent=1 // pred_check
      _
    $region7: #{tpu_custom_call.1} parent=1 // pred_check_branch
      %18 = sbr.rel (0) target = $region9
    $region8: #{tpu_custom_call.1} parent=1 // pred_region
      _
    $region9: #{tpu_custom_call.1} parent=1 // pred_fallthru
      _
    // Predicated region
    $region10: #{tpu_custom_call.1} parent=1 // pred_check
      _
    $region11: #{tpu_custom_call.1} parent=1 // pred_check_branch
      %20 = sbr.rel (0) target = $region13
    $region12: #{tpu_custom_call.1} parent=1 // pred_region
      _
    $region13: #{tpu_custom_call.1} parent=1 // pred_fallthru
      _
    // Predicated region
    $region14: #{tpu_custom_call.1} parent=1 // pred_check
      _
    $region15: #{tpu_custom_call.1} parent=1 // pred_check_branch
      %22 = sbr.rel (0) target = $region17
    $region16: #{tpu_custom_call.1} parent=1 // pred_region
      _
    $region17: #{tpu_custom_call.1} parent=1 // pred_fallthru
      _
    // Predicated region
    $region18: #{tpu_custom_call.1} parent=1 // pred_check
      _
    $region19: #{tpu_custom_call.1} parent=1 // pred_check_branch
      %24 = sbr.rel (0) target = $region21
    $region20: #{tpu_custom_call.1} parent=1 // pred_region
      _
    $region21: #{tpu_custom_call.1} parent=1 // pred_fallthru
      _
    // Predicated region
    $region22: #{tpu_custom_call.1} parent=1 // pred_check
      _
    $region23: #{tpu_custom_call.1} parent=1 // pred_check_branch
      %26 = sbr.rel (0) target = $region25
    $region24: #{tpu_custom_call.1} parent=1 // pred_region
      _
    $region25: #{tpu_custom_call.1} parent=1 // pred_fallthru
      _
    // Predicated region
    $region26: #{tpu_custom_call.1} parent=1 // pred_check
      _
    $region27: #{tpu_custom_call.1} parent=1 // pred_check_branch
      %28 = sbr.rel (0) target = $region29
    $region28: #{tpu_custom_call.1} parent=1 // pred_region
      _
    $region29: #{tpu_custom_call.1} parent=1 // pred_fallthru
      _
    %v30 = vld [vmem:[%s0] sm:$0xff]
    %v31 = vld [vmem:[%s0 + $0x8] sm:$0xff]
    %v32 = vld [vmem:[%s0 + $0x10] sm:$0xff]
    %v33 = vld [vmem:[%s0 + $0x18] sm:$0xff]
    %v34 = vld [vmem:[%s0 + $0x20] sm:$0xff]
    %v35 = vld [vmem:[%s0 + $0x28] sm:$0xff]
    %v36 = vld [vmem:[%s0 + $0x30] sm:$0xff]
    %v37 = vld [vmem:[%s0 + $0x38] sm:$0xff]
    %v38 = vld [vmem:[%s0 + $0x40] sm:$0xff]
    %v39 = vld [vmem:[%s0 + $0x48] sm:$0xff]
    %v40 = vld [vmem:[%s0 + $0x50] sm:$0xff]
    %v41 = vld [vmem:[%s0 + $0x58] sm:$0xff]
    %v42 = vld [vmem:[%s0 + $0x60] sm:$0xff]
    %v43 = vld [vmem:[%s0 + $0x68] sm:$0xff]
    %v44 = vld [vmem:[%s0 + $0x70] sm:$0xff]
    %v45 = vld [vmem:[%s0 + $0x78] sm:$0xff]
    %v46 = vld [vmem:[%s0 + $0x80] sm:$0xff]
    %v47 = vld [vmem:[%s0 + $0x88] sm:$0xff]
    %v48 = vld [vmem:[%s0 + $0x90] sm:$0xff]
    %v49 = vld [vmem:[%s0 + $0x98] sm:$0xff]
    %v50 = vld [vmem:[%s0 + $0xa0] sm:$0xff]
    %v51 = vld [vmem:[%s0 + $0xa8] sm:$0xff]
    %v52 = vld [vmem:[%s0 + $0xb0] sm:$0xff]
    %v53 = vld [vmem:[%s0 + $0xb8] sm:$0xff]
    %v54 = vld [vmem:[%s0 + $0xc0] sm:$0xff]
    %v55 = vld [vmem:[%s0 + $0xc8] sm:$0xff]
    %v56 = vld [vmem:[%s0 + $0xd0] sm:$0xff]
    %v57 = vld [vmem:[%s0 + $0xd8] sm:$0xff]
    %v58 = vld [vmem:[%s0 + $0xe0] sm:$0xff]
    %v59 = vld [vmem:[%s0 + $0xe8] sm:$0xff]
    %v60 = vld [vmem:[%s0 + $0xf0] sm:$0xff]
    %v61 = vld [vmem:[%s0 + $0xf8] sm:$0xff]
    %v62 = vld [vmem:[%s0 + $0x100] sm:$0xff]
    %v63 = vld [vmem:[%s0 + $0x108] sm:$0xff]
    %v64 = vld [vmem:[%s0 + $0x110] sm:$0xff]
    %v65 = vld [vmem:[%s0 + $0x118] sm:$0xff]
    %v66 = vld [vmem:[%s0 + $0x120] sm:$0xff]
    %v67 = vld [vmem:[%s0 + $0x128] sm:$0xff]
    %v68 = vld [vmem:[%s0 + $0x130] sm:$0xff]
    %v69 = vld [vmem:[%s0 + $0x138] sm:$0xff]
    %v70 = vld [vmem:[%s0 + $0x140] sm:$0xff]
    %v71 = vld [vmem:[%s0 + $0x148] sm:$0xff]
    %v72 = vld [vmem:[%s0 + $0x150] sm:$0xff]
    %v73 = vld [vmem:[%s0 + $0x158] sm:$0xff]
    %v74 = vld [vmem:[%s0 + $0x160] sm:$0xff]
    %v75 = vld [vmem:[%s0 + $0x168] sm:$0xff]
    %v76 = vld [vmem:[%s0 + $0x170] sm:$0xff]
    %v77 = vld [vmem:[%s0 + $0x178] sm:$0xff]
    %v78 = vld [vmem:[%s0 + $0x180] sm:$0xff]
    %v79 = vld [vmem:[%s0 + $0x188] sm:$0xff]
    %v80 = vld [vmem:[%s0 + $0x190] sm:$0xff]
    %v81 = vld [vmem:[%s0 + $0x198] sm:$0xff]
    %v82 = vld [vmem:[%s0 + $0x1a0] sm:$0xff]
    %v83 = vld [vmem:[%s0 + $0x1a8] sm:$0xff]
    %v84 = vld [vmem:[%s0 + $0x1b0] sm:$0xff]
    %v85 = vld [vmem:[%s0 + $0x1b8] sm:$0xff]
    %v86 = vld [vmem:[%s0 + $0x1c0] sm:$0xff]
    %v87 = vld [vmem:[%s0 + $0x1c8] sm:$0xff]
    %v88 = vld [vmem:[%s0 + $0x1d0] sm:$0xff]
    %v89 = vld [vmem:[%s0 + $0x1d8] sm:$0xff]
    %v90 = vld [vmem:[%s0 + $0x1e0] sm:$0xff]
    %v91 = vld [vmem:[%s0 + $0x1e8] sm:$0xff]
    %v92 = vld [vmem:[%s0 + $0x1f0] sm:$0xff]
    %v93 = vld [vmem:[%s0 + $0x1f8] sm:$0xff]
    %v94 = vld [vmem:[%s0 + $0x200] sm:$0xff]
    %v95 = vld [vmem:[%s0 + $0x208] sm:$0xff]
    %v96 = vld [vmem:[%s0 + $0x210] sm:$0xff]
    %v97 = vld [vmem:[%s0 + $0x218] sm:$0xff]
    %v98 = vld [vmem:[%s0 + $0x220] sm:$0xff]
    %v99 = vld [vmem:[%s0 + $0x228] sm:$0xff]
    %v100 = vld [vmem:[%s0 + $0x230] sm:$0xff]
    %v101 = vld [vmem:[%s0 + $0x238] sm:$0xff]
    %v102 = vld [vmem:[%s0 + $0x240] sm:$0xff]
    %v103 = vld [vmem:[%s0 + $0x248] sm:$0xff]
    %v104 = vld [vmem:[%s0 + $0x250] sm:$0xff]
    %v105 = vld [vmem:[%s0 + $0x258] sm:$0xff]
    %v106 = vld [vmem:[%s0 + $0x260] sm:$0xff]
    %v107 = vld [vmem:[%s0 + $0x268] sm:$0xff]
    %v108 = vld [vmem:[%s0 + $0x270] sm:$0xff]
    %v109 = vld [vmem:[%s0 + $0x278] sm:$0xff]
    %v110 = vld [vmem:[%s0 + $0x280] sm:$0xff]
    %v111 = vld [vmem:[%s0 + $0x288] sm:$0xff]
    %v112 = vld [vmem:[%s0 + $0x290] sm:$0xff]
    %v113 = vld [vmem:[%s0 + $0x298] sm:$0xff]
    %v114 = vld [vmem:[%s0 + $0x2a0] sm:$0xff]
    %v115 = vld [vmem:[%s0 + $0x2a8] sm:$0xff]
    %v116 = vld [vmem:[%s0 + $0x2b0] sm:$0xff]
    %v117 = vld [vmem:[%s0 + $0x2b8] sm:$0xff]
    %v118 = vld [vmem:[%s0 + $0x2c0] sm:$0xff]
    %v119 = vld [vmem:[%s0 + $0x2c8] sm:$0xff]
    %v120 = vld [vmem:[%s0 + $0x2d0] sm:$0xff]
    %v121 = vld [vmem:[%s0 + $0x2d8] sm:$0xff]
    %v122 = vld [vmem:[%s0 + $0x2e0] sm:$0xff]
    %v123 = vld [vmem:[%s0 + $0x2e8] sm:$0xff]
    %v124 = vld [vmem:[%s0 + $0x2f0] sm:$0xff]
    %v125 = vld [vmem:[%s0 + $0x2f8] sm:$0xff]
    %v126 = vld [vmem:[%s0 + $0x300] sm:$0xff]
    %v127 = vld [vmem:[%s0 + $0x308] sm:$0xff]
    %v128 = vld [vmem:[%s0 + $0x310] sm:$0xff]
    %v129 = vld [vmem:[%s0 + $0x318] sm:$0xff]
    %v130 = vld [vmem:[%s0 + $0x320] sm:$0xff]
    %v131 = vld [vmem:[%s0 + $0x328] sm:$0xff]
    %v132 = vld [vmem:[%s0 + $0x330] sm:$0xff]
    %v133 = vld [vmem:[%s0 + $0x338] sm:$0xff]
    %v134 = vld [vmem:[%s0 + $0x340] sm:$0xff]
    %v135 = vld [vmem:[%s0 + $0x348] sm:$0xff]
    %v136 = vld [vmem:[%s0 + $0x350] sm:$0xff]
    %v137 = vld [vmem:[%s0 + $0x358] sm:$0xff]
    %v138 = vld [vmem:[%s0 + $0x360] sm:$0xff]
    %v139 = vld [vmem:[%s0 + $0x368] sm:$0xff]
    %v140 = vld [vmem:[%s0 + $0x370] sm:$0xff]
    %v141 = vld [vmem:[%s0 + $0x378] sm:$0xff]
    %v142 = vld [vmem:[%s0 + $0x380] sm:$0xff]
    %v143 = vld [vmem:[%s0 + $0x388] sm:$0xff]
    %v144 = vld [vmem:[%s0 + $0x390] sm:$0xff]
    %v145 = vld [vmem:[%s0 + $0x398] sm:$0xff]
    %v146 = vld [vmem:[%s0 + $0x3a0] sm:$0xff]
    %v147 = vld [vmem:[%s0 + $0x3a8] sm:$0xff]
    %v148 = vld [vmem:[%s0 + $0x3b0] sm:$0xff]
    %v149 = vld [vmem:[%s0 + $0x3b8] sm:$0xff]
    %v150 = vld [vmem:[%s0 + $0x3c0] sm:$0xff]
    %v151 = vld [vmem:[%s0 + $0x3c8] sm:$0xff]
    %v152 = vld [vmem:[%s0 + $0x3d0] sm:$0xff]
    %v153 = vld [vmem:[%s0 + $0x3d8] sm:$0xff]
    %v154 = vld [vmem:[%s0 + $0x3e0] sm:$0xff]
    %v155 = vld [vmem:[%s0 + $0x3e8] sm:$0xff]
    %v156 = vld [vmem:[%s0 + $0x3f0] sm:$0xff]
    %v157 = vld [vmem:[%s0 + $0x3f8] sm:$0xff]
    %v158 = vpack.c.bf16 %v31, %v30
    %v159 = vpack.c.bf16 %v33, %v32
    %v160 = vpack.c.bf16 %v35, %v34
    %v161 = vpack.c.bf16 %v37, %v36
    %v162 = vpack.c.bf16 %v39, %v38
    %v163 = vpack.c.bf16 %v41, %v40
    %v164 = vpack.c.bf16 %v43, %v42
    %v165 = vpack.c.bf16 %v45, %v44
    %v166 = vpack.c.bf16 %v47, %v46
    %v167 = vpack.c.bf16 %v49, %v48
    %v168 = vpack.c.bf16 %v51, %v50
    %v169 = vpack.c.bf16 %v53, %v52
    %v170 = vpack.c.bf16 %v55, %v54
    %v171 = vpack.c.bf16 %v57, %v56
    %v172 = vpack.c.bf16 %v59, %v58
    %v173 = vpack.c.bf16 %v61, %v60
    %v174 = vpack.c.bf16 %v63, %v62
    %v175 = vpack.c.bf16 %v65, %v64
    %v176 = vpack.c.bf16 %v67, %v66
    %v177 = vpack.c.bf16 %v69, %v68
    %v178 = vpack.c.bf16 %v71, %v70
    %v179 = vpack.c.bf16 %v73, %v72
    %v180 = vpack.c.bf16 %v75, %v74
    %v181 = vpack.c.bf16 %v77, %v76
    %v182 = vpack.c.bf16 %v79, %v78
    %v183 = vpack.c.bf16 %v81, %v80
    %v184 = vpack.c.bf16 %v83, %v82
    %v185 = vpack.c.bf16 %v85, %v84
    %v186 = vpack.c.bf16 %v87, %v86
    %v187 = vpack.c.bf16 %v89, %v88
    %v188 = vpack.c.bf16 %v91, %v90
    %v189 = vpack.c.bf16 %v93, %v92
    %v190 = vpack.c.bf16 %v95, %v94
    %v191 = vpack.c.bf16 %v97, %v96
    %v192 = vpack.c.bf16 %v99, %v98
    %v193 = vpack.c.bf16 %v101, %v100
    %v194 = vpack.c.bf16 %v103, %v102
    %v195 = vpack.c.bf16 %v105, %v104
    %v196 = vpack.c.bf16 %v107, %v106
    %v197 = vpack.c.bf16 %v109, %v108
    %v198 = vpack.c.bf16 %v111, %v110
    %v199 = vpack.c.bf16 %v113, %v112
    %v200 = vpack.c.bf16 %v115, %v114
    %v201 = vpack.c.bf16 %v117, %v116
    %v202 = vpack.c.bf16 %v119, %v118
    %v203 = vpack.c.bf16 %v121, %v120
    %v204 = vpack.c.bf16 %v123, %v122
    %v205 = vpack.c.bf16 %v125, %v124
    %v206 = vpack.c.bf16 %v127, %v126
    %v207 = vpack.c.bf16 %v129, %v128
    %v208 = vpack.c.bf16 %v131, %v130
    %v209 = vpack.c.bf16 %v133, %v132
    %v210 = vpack.c.bf16 %v135, %v134
    %v211 = vpack.c.bf16 %v137, %v136
    %v212 = vpack.c.bf16 %v139, %v138
    %v213 = vpack.c.bf16 %v141, %v140
    %v214 = vpack.c.bf16 %v143, %v142
    %v215 = vpack.c.bf16 %v145, %v144
    %v216 = vpack.c.bf16 %v147, %v146
    %v217 = vpack.c.bf16 %v149, %v148
    %v218 = vpack.c.bf16 %v151, %v150
    %v219 = vpack.c.bf16 %v153, %v152
    %v220 = vpack.c.bf16 %v155, %v154
    %v221 = vpack.c.bf16 %v157, %v156
    %v222 = vld [vmem:[%s1] sm:$0xf]
    %v223 = vld [vmem:[%s1 + $0x4] sm:$0xf]
    %v224 = vld [vmem:[%s2] sm:$0x1]
    %v226 = vperm.slane %v224, 0
    %v230 = vunpack.c.l.b16 %v222
    %v231 = vunpack.c.l.b16 %v223
    %v232 = vpack.c.b16 %v231, %v230
    %vm233 = vcmask 121856
    %v235 = vsel %vm233, %v158, 0
    %v238 = vsel %vm233, %v159, 0
    %v241 = vsel %vm233, %v160, 0
    %v244 = vsel %vm233, %v161, 0
    %v247 = vsel %vm233, %v162, 0
    %v250 = vsel %vm233, %v163, 0
    %v253 = vsel %vm233, %v164, 0
    %v256 = vsel %vm233, %v165, 0
    %v259 = vsel %vm233, %v166, 0
    %v262 = vsel %vm233, %v167, 0
    %v265 = vsel %vm233, %v168, 0
    %v268 = vsel %vm233, %v169, 0
    %v271 = vsel %vm233, %v170, 0
    %v274 = vsel %vm233, %v171, 0
    %v277 = vsel %vm233, %v172, 0
    %v280 = vsel %vm233, %v173, 0
    %v283 = vsel %vm233, %v174, 0
    %v286 = vsel %vm233, %v175, 0
    %v289 = vsel %vm233, %v176, 0
    %v292 = vsel %vm233, %v177, 0
    %v295 = vsel %vm233, %v178, 0
    %v298 = vsel %vm233, %v179, 0
    %v301 = vsel %vm233, %v180, 0
    %v304 = vsel %vm233, %v181, 0
    %v307 = vsel %vm233, %v182, 0
    %v310 = vsel %vm233, %v183, 0
    %v313 = vsel %vm233, %v184, 0
    %v316 = vsel %vm233, %v185, 0
    %v319 = vsel %vm233, %v186, 0
    %v322 = vsel %vm233, %v187, 0
    %v325 = vsel %vm233, %v188, 0
    %v328 = vsel %vm233, %v189, 0
    %v331 = vsel %vm233, %v190, 0
    %v334 = vsel %vm233, %v191, 0
    %v337 = vsel %vm233, %v192, 0
    %v340 = vsel %vm233, %v193, 0
    %v343 = vsel %vm233, %v194, 0
    %v346 = vsel %vm233, %v195, 0
    %v349 = vsel %vm233, %v196, 0
    %v352 = vsel %vm233, %v197, 0
    %v355 = vsel %vm233, %v198, 0
    %v358 = vsel %vm233, %v199, 0
    %v361 = vsel %vm233, %v200, 0
    %v364 = vsel %vm233, %v201, 0
    %v367 = vsel %vm233, %v202, 0
    %v370 = vsel %vm233, %v203, 0
    %v373 = vsel %vm233, %v204, 0
    %v376 = vsel %vm233, %v205, 0
    %v379 = vsel %vm233, %v206, 0
    %v382 = vsel %vm233, %v207, 0
    %v385 = vsel %vm233, %v208, 0
    %v388 = vsel %vm233, %v209, 0
    %v391 = vsel %vm233, %v210, 0
    %v394 = vsel %vm233, %v211, 0
    %v397 = vsel %vm233, %v212, 0
    %v400 = vsel %vm233, %v213, 0
    %v403 = vsel %vm233, %v214, 0
    %v406 = vsel %vm233, %v215, 0
    %v409 = vsel %vm233, %v216, 0
    %v412 = vsel %vm233, %v217, 0
    %v415 = vsel %vm233, %v218, 0
    %v418 = vsel %vm233, %v219, 0
    %v421 = vsel %vm233, %v220, 0
    %v424 = vsel %vm233, %v221, 0
    %vm426 = vcmask 1046528
    %vm427 = vcmask 1047552
    %v428 = vsel %vm426, 4294967295, 65535
    %v429 = vsel %vm427, %v428, 0
    %v431 = vand.u32 %v232, %v429
    %433 = vmatpush.bf16.msra.mxu0 0
    %434 = vmatpush.bf16.msra.mxu0 0
    %435 = vmatpush.bf16.msra.mxu0 0
    %436 = vmatpush.bf16.msra.mxu0 0
    %437 = vmatpush.bf16.msra.mxu0 0
    %438 = vmatpush.bf16.msra.mxu0 0
    %439 = vmatpush.bf16.msra.mxu0 0
    %440 = vmatpush.bf16.msra.mxu0 %v431
    %441 = vmatmul.bf16.gmra.mxu0 %v235
    %v442 = vpop.f32.mrf.mxu0
    %v443 = vadd.f32 %v226, %v442
    %v444 = vpop.f32.mrf.mxu0
    %v445 = vadd.f32 %v226, %v444
    %446 = vmatmul.bf16.gmra.mxu0 %v238
    %v447 = vpop.f32.mrf.mxu0
    %v448 = vadd.f32 %v226, %v447
    %v449 = vpop.f32.mrf.mxu0
    %v450 = vadd.f32 %v226, %v449
    %451 = vmatmul.bf16.gmra.mxu0 %v241
    %v452 = vpop.f32.mrf.mxu0
    %v453 = vadd.f32 %v226, %v452
    %v454 = vpop.f32.mrf.mxu0
    %v455 = vadd.f32 %v226, %v454
    %456 = vmatmul.bf16.gmra.mxu0 %v244
    %v457 = vpop.f32.mrf.mxu0
    %v458 = vadd.f32 %v226, %v457
    %v459 = vpop.f32.mrf.mxu0
    %v460 = vadd.f32 %v226, %v459
    %461 = vmatmul.bf16.gmra.mxu0 %v247
    %v462 = vpop.f32.mrf.mxu0
    %v463 = vadd.f32 %v226, %v462
    %v464 = vpop.f32.mrf.mxu0
    %v465 = vadd.f32 %v226, %v464
    %466 = vmatmul.bf16.gmra.mxu0 %v250
    %v467 = vpop.f32.mrf.mxu0
    %v468 = vadd.f32 %v226, %v467
    %v469 = vpop.f32.mrf.mxu0
    %v470 = vadd.f32 %v226, %v469
    %471 = vmatmul.bf16.gmra.mxu0 %v253
    %v472 = vpop.f32.mrf.mxu0
    %v473 = vadd.f32 %v226, %v472
    %v474 = vpop.f32.mrf.mxu0
    %v475 = vadd.f32 %v226, %v474
    %476 = vmatmul.bf16.gmra.mxu0 %v256
    %v477 = vpop.f32.mrf.mxu0
    %v478 = vadd.f32 %v226, %v477
    %v479 = vpop.f32.mrf.mxu0
    %v480 = vadd.f32 %v226, %v479
    %481 = vmatmul.bf16.gmra.mxu0 %v259
    %v482 = vpop.f32.mrf.mxu0
    %v483 = vadd.f32 %v226, %v482
    %v484 = vpop.f32.mrf.mxu0
    %v485 = vadd.f32 %v226, %v484
    %486 = vmatmul.bf16.gmra.mxu0 %v262
    %v487 = vpop.f32.mrf.mxu0
    %v488 = vadd.f32 %v226, %v487
    %v489 = vpop.f32.mrf.mxu0
    %v490 = vadd.f32 %v226, %v489
    %491 = vmatmul.bf16.gmra.mxu0 %v265
    %v492 = vpop.f32.mrf.mxu0
    %v493 = vadd.f32 %v226, %v492
    %v494 = vpop.f32.mrf.mxu0
    %v495 = vadd.f32 %v226, %v494
    %496 = vmatmul.bf16.gmra.mxu0 %v268
    %v497 = vpop.f32.mrf.mxu0
    %v498 = vadd.f32 %v226, %v497
    %v499 = vpop.f32.mrf.mxu0
    %v500 = vadd.f32 %v226, %v499
    %501 = vmatmul.bf16.gmra.mxu0 %v271
    %v502 = vpop.f32.mrf.mxu0
    %v503 = vadd.f32 %v226, %v502
    %v504 = vpop.f32.mrf.mxu0
    %v505 = vadd.f32 %v226, %v504
    %506 = vmatmul.bf16.gmra.mxu0 %v274
    %v507 = vpop.f32.mrf.mxu0
    %v508 = vadd.f32 %v226, %v507
    %v509 = vpop.f32.mrf.mxu0
    %v510 = vadd.f32 %v226, %v509
    %511 = vmatmul.bf16.gmra.mxu0 %v277
    %v512 = vpop.f32.mrf.mxu0
    %v513 = vadd.f32 %v226, %v512
    %v514 = vpop.f32.mrf.mxu0
    %v515 = vadd.f32 %v226, %v514
    %516 = vmatmul.bf16.gmra.mxu0 %v280
    %v517 = vpop.f32.mrf.mxu0
    %v518 = vadd.f32 %v226, %v517
    %v519 = vpop.f32.mrf.mxu0
    %v520 = vadd.f32 %v226, %v519
    %521 = vmatmul.bf16.gmra.mxu0 %v283
    %v522 = vpop.f32.mrf.mxu0
    %v523 = vadd.f32 %v226, %v522
    %v524 = vpop.f32.mrf.mxu0
    %v525 = vadd.f32 %v226, %v524
    %526 = vmatmul.bf16.gmra.mxu0 %v286
    %v527 = vpop.f32.mrf.mxu0
    %v528 = vadd.f32 %v226, %v527
    %v529 = vpop.f32.mrf.mxu0
    %v530 = vadd.f32 %v226, %v529
    %531 = vmatmul.bf16.gmra.mxu0 %v289
    %v532 = vpop.f32.mrf.mxu0
    %v533 = vadd.f32 %v226, %v532
    %v534 = vpop.f32.mrf.mxu0
    %v535 = vadd.f32 %v226, %v534
    %536 = vmatmul.bf16.gmra.mxu0 %v292
    %v537 = vpop.f32.mrf.mxu0
    %v538 = vadd.f32 %v226, %v537
    %v539 = vpop.f32.mrf.mxu0
    %v540 = vadd.f32 %v226, %v539
    %541 = vmatmul.bf16.gmra.mxu0 %v295
    %v542 = vpop.f32.mrf.mxu0
    %v543 = vadd.f32 %v226, %v542
    %v544 = vpop.f32.mrf.mxu0
    %v545 = vadd.f32 %v226, %v544
    %546 = vmatmul.bf16.gmra.mxu0 %v298
    %v547 = vpop.f32.mrf.mxu0
    %v548 = vadd.f32 %v226, %v547
    %v549 = vpop.f32.mrf.mxu0
    %v550 = vadd.f32 %v226, %v549
    %551 = vmatmul.bf16.gmra.mxu0 %v301
    %v552 = vpop.f32.mrf.mxu0
    %v553 = vadd.f32 %v226, %v552
    %v554 = vpop.f32.mrf.mxu0
    %v555 = vadd.f32 %v226, %v554
    %556 = vmatmul.bf16.gmra.mxu0 %v304
    %v557 = vpop.f32.mrf.mxu0
    %v558 = vadd.f32 %v226, %v557
    %v559 = vpop.f32.mrf.mxu0
    %v560 = vadd.f32 %v226, %v559
    %561 = vmatmul.bf16.gmra.mxu0 %v307
    %v562 = vpop.f32.mrf.mxu0
    %v563 = vadd.f32 %v226, %v562
    %v564 = vpop.f32.mrf.mxu0
    %v565 = vadd.f32 %v226, %v564
    %566 = vmatmul.bf16.gmra.mxu0 %v310
    %v567 = vpop.f32.mrf.mxu0
    %v568 = vadd.f32 %v226, %v567
    %v569 = vpop.f32.mrf.mxu0
    %v570 = vadd.f32 %v226, %v569
    %571 = vmatmul.bf16.gmra.mxu0 %v313
    %v572 = vpop.f32.mrf.mxu0
    %v573 = vadd.f32 %v226, %v572
    %v574 = vpop.f32.mrf.mxu0
    %v575 = vadd.f32 %v226, %v574
    %576 = vmatmul.bf16.gmra.mxu0 %v316
    %v577 = vpop.f32.mrf.mxu0
    %v578 = vadd.f32 %v226, %v577
    %v579 = vpop.f32.mrf.mxu0
    %v580 = vadd.f32 %v226, %v579
    %581 = vmatmul.bf16.gmra.mxu0 %v319
    %v582 = vpop.f32.mrf.mxu0
    %v583 = vadd.f32 %v226, %v582
    %v584 = vpop.f32.mrf.mxu0
    %v585 = vadd.f32 %v226, %v584
    %586 = vmatmul.bf16.gmra.mxu0 %v322
    %v587 = vpop.f32.mrf.mxu0
    %v588 = vadd.f32 %v226, %v587
    %v589 = vpop.f32.mrf.mxu0
    %v590 = vadd.f32 %v226, %v589
    %591 = vmatmul.bf16.gmra.mxu0 %v325
    %v592 = vpop.f32.mrf.mxu0
    %v593 = vadd.f32 %v226, %v592
    %v594 = vpop.f32.mrf.mxu0
    %v595 = vadd.f32 %v226, %v594
    %596 = vmatmul.bf16.gmra.mxu0 %v328
    %v597 = vpop.f32.mrf.mxu0
    %v598 = vadd.f32 %v226, %v597
    %v599 = vpop.f32.mrf.mxu0
    %v600 = vadd.f32 %v226, %v599
    %601 = vmatmul.bf16.gmra.mxu0 %v331
    %v602 = vpop.f32.mrf.mxu0
    %v603 = vadd.f32 %v226, %v602
    %v604 = vpop.f32.mrf.mxu0
    %v605 = vadd.f32 %v226, %v604
    %606 = vmatmul.bf16.gmra.mxu0 %v334
    %v607 = vpop.f32.mrf.mxu0
    %v608 = vadd.f32 %v226, %v607
    %v609 = vpop.f32.mrf.mxu0
    %v610 = vadd.f32 %v226, %v609
    %611 = vmatmul.bf16.gmra.mxu0 %v337
    %v612 = vpop.f32.mrf.mxu0
    %v613 = vadd.f32 %v226, %v612
    %v614 = vpop.f32.mrf.mxu0
    %v615 = vadd.f32 %v226, %v614
    %616 = vmatmul.bf16.gmra.mxu0 %v340
    %v617 = vpop.f32.mrf.mxu0
    %v618 = vadd.f32 %v226, %v617
    %v619 = vpop.f32.mrf.mxu0
    %v620 = vadd.f32 %v226, %v619
    %621 = vmatmul.bf16.gmra.mxu0 %v343
    %v622 = vpop.f32.mrf.mxu0
    %v623 = vadd.f32 %v226, %v622
    %v624 = vpop.f32.mrf.mxu0
    %v625 = vadd.f32 %v226, %v624
    %626 = vmatmul.bf16.gmra.mxu0 %v346
    %v627 = vpop.f32.mrf.mxu0
    %v628 = vadd.f32 %v226, %v627
    %v629 = vpop.f32.mrf.mxu0
    %v630 = vadd.f32 %v226, %v629
    %631 = vmatmul.bf16.gmra.mxu0 %v349
    %v632 = vpop.f32.mrf.mxu0
    %v633 = vadd.f32 %v226, %v632
    %v634 = vpop.f32.mrf.mxu0
    %v635 = vadd.f32 %v226, %v634
    %636 = vmatmul.bf16.gmra.mxu0 %v352
    %v637 = vpop.f32.mrf.mxu0
    %v638 = vadd.f32 %v226, %v637
    %v639 = vpop.f32.mrf.mxu0
    %v640 = vadd.f32 %v226, %v639
    %641 = vmatmul.bf16.gmra.mxu0 %v355
    %v642 = vpop.f32.mrf.mxu0
    %v643 = vadd.f32 %v226, %v642
    %v644 = vpop.f32.mrf.mxu0
    %v645 = vadd.f32 %v226, %v644
    %646 = vmatmul.bf16.gmra.mxu0 %v358
    %v647 = vpop.f32.mrf.mxu0
    %v648 = vadd.f32 %v226, %v647
    %v649 = vpop.f32.mrf.mxu0
    %v650 = vadd.f32 %v226, %v649
    %651 = vmatmul.bf16.gmra.mxu0 %v361
    %v652 = vpop.f32.mrf.mxu0
    %v653 = vadd.f32 %v226, %v652
    %v654 = vpop.f32.mrf.mxu0
    %v655 = vadd.f32 %v226, %v654
    %656 = vmatmul.bf16.gmra.mxu0 %v364
    %v657 = vpop.f32.mrf.mxu0
    %v658 = vadd.f32 %v226, %v657
    %v659 = vpop.f32.mrf.mxu0
    %v660 = vadd.f32 %v226, %v659
    %661 = vmatmul.bf16.gmra.mxu0 %v367
    %v662 = vpop.f32.mrf.mxu0
    %v663 = vadd.f32 %v226, %v662
    %v664 = vpop.f32.mrf.mxu0
    %v665 = vadd.f32 %v226, %v664
    %666 = vmatmul.bf16.gmra.mxu0 %v370
    %v667 = vpop.f32.mrf.mxu0
    %v668 = vadd.f32 %v226, %v667
    %v669 = vpop.f32.mrf.mxu0
    %v670 = vadd.f32 %v226, %v669
    %671 = vmatmul.bf16.gmra.mxu0 %v373
    %v672 = vpop.f32.mrf.mxu0
    %v673 = vadd.f32 %v226, %v672
    %v674 = vpop.f32.mrf.mxu0
    %v675 = vadd.f32 %v226, %v674
    %676 = vmatmul.bf16.gmra.mxu0 %v376
    %v677 = vpop.f32.mrf.mxu0
    %v678 = vadd.f32 %v226, %v677
    %v679 = vpop.f32.mrf.mxu0
    %v680 = vadd.f32 %v226, %v679
    %681 = vmatmul.bf16.gmra.mxu0 %v379
    %v682 = vpop.f32.mrf.mxu0
    %v683 = vadd.f32 %v226, %v682
    %v684 = vpop.f32.mrf.mxu0
    %v685 = vadd.f32 %v226, %v684
    %686 = vmatmul.bf16.gmra.mxu0 %v382
    %v687 = vpop.f32.mrf.mxu0
    %v688 = vadd.f32 %v226, %v687
    %v689 = vpop.f32.mrf.mxu0
    %v690 = vadd.f32 %v226, %v689
    %691 = vmatmul.bf16.gmra.mxu0 %v385
    %v692 = vpop.f32.mrf.mxu0
    %v693 = vadd.f32 %v226, %v692
    %v694 = vpop.f32.mrf.mxu0
    %v695 = vadd.f32 %v226, %v694
    %696 = vmatmul.bf16.gmra.mxu0 %v388
    %v697 = vpop.f32.mrf.mxu0
    %v698 = vadd.f32 %v226, %v697
    %v699 = vpop.f32.mrf.mxu0
    %v700 = vadd.f32 %v226, %v699
    %701 = vmatmul.bf16.gmra.mxu0 %v391
    %v702 = vpop.f32.mrf.mxu0
    %v703 = vadd.f32 %v226, %v702
    %v704 = vpop.f32.mrf.mxu0
    %v705 = vadd.f32 %v226, %v704
    %706 = vmatmul.bf16.gmra.mxu0 %v394
    %v707 = vpop.f32.mrf.mxu0
    %v708 = vadd.f32 %v226, %v707
    %v709 = vpop.f32.mrf.mxu0
    %v710 = vadd.f32 %v226, %v709
    %711 = vmatmul.bf16.gmra.mxu0 %v397
    %v712 = vpop.f32.mrf.mxu0
    %v713 = vadd.f32 %v226, %v712
    %v714 = vpop.f32.mrf.mxu0
    %v715 = vadd.f32 %v226, %v714
    %716 = vmatmul.bf16.gmra.mxu0 %v400
    %v717 = vpop.f32.mrf.mxu0
    %v718 = vadd.f32 %v226, %v717
    %v719 = vpop.f32.mrf.mxu0
    %v720 = vadd.f32 %v226, %v719
    %721 = vmatmul.bf16.gmra.mxu0 %v403
    %v722 = vpop.f32.mrf.mxu0
    %v723 = vadd.f32 %v226, %v722
    %v724 = vpop.f32.mrf.mxu0
    %v725 = vadd.f32 %v226, %v724
    %726 = vmatmul.bf16.gmra.mxu0 %v406
    %v727 = vpop.f32.mrf.mxu0
    %v728 = vadd.f32 %v226, %v727
    %v729 = vpop.f32.mrf.mxu0
    %v730 = vadd.f32 %v226, %v729
    %731 = vmatmul.bf16.gmra.mxu0 %v409
    %v732 = vpop.f32.mrf.mxu0
    %v733 = vadd.f32 %v226, %v732
    %v734 = vpop.f32.mrf.mxu0
    %v735 = vadd.f32 %v226, %v734
    %736 = vmatmul.bf16.gmra.mxu0 %v412
    %v737 = vpop.f32.mrf.mxu0
    %v738 = vadd.f32 %v226, %v737
    %v739 = vpop.f32.mrf.mxu0
    %v740 = vadd.f32 %v226, %v739
    %741 = vmatmul.bf16.gmra.mxu0 %v415
    %v742 = vpop.f32.mrf.mxu0
    %v743 = vadd.f32 %v226, %v742
    %v744 = vpop.f32.mrf.mxu0
    %v745 = vadd.f32 %v226, %v744
    %746 = vmatmul.bf16.gmra.mxu0 %v418
    %v747 = vpop.f32.mrf.mxu0
    %v748 = vadd.f32 %v226, %v747
    %v749 = vpop.f32.mrf.mxu0
    %v750 = vadd.f32 %v226, %v749
    %751 = vmatmul.bf16.gmra.mxu0 %v421
    %v752 = vpop.f32.mrf.mxu0
    %v753 = vadd.f32 %v226, %v752
    %v754 = vpop.f32.mrf.mxu0
    %v755 = vadd.f32 %v226, %v754
    %756 = vmatmul.bf16.gmra.mxu0 %v424
    %v757 = vpop.f32.mrf.mxu0
    %v758 = vadd.f32 %v226, %v757
    %v759 = vpop.f32.mrf.mxu0
    %v760 = vadd.f32 %v226, %v759
    %761 = vdwg.mxu0
    %v762 = vmax.f32 %v443, 0.0
    %v763 = vmax.f32 %v445, 0.0
    %v764 = vmax.f32 %v448, 0.0
    %v765 = vmax.f32 %v450, 0.0
    %v766 = vmax.f32 %v453, 0.0
    %v767 = vmax.f32 %v455, 0.0
    %v768 = vmax.f32 %v458, 0.0
    %v769 = vmax.f32 %v460, 0.0
    %v770 = vmax.f32 %v463, 0.0
    %v771 = vmax.f32 %v465, 0.0
    %v772 = vmax.f32 %v468, 0.0
    %v773 = vmax.f32 %v470, 0.0
    %v774 = vmax.f32 %v473, 0.0
    %v775 = vmax.f32 %v475, 0.0
    %v776 = vmax.f32 %v478, 0.0
    %v777 = vmax.f32 %v480, 0.0
    %v778 = vmax.f32 %v483, 0.0
    %v779 = vmax.f32 %v485, 0.0
    %v780 = vmax.f32 %v488, 0.0
    %v781 = vmax.f32 %v490, 0.0
    %v782 = vmax.f32 %v493, 0.0
    %v783 = vmax.f32 %v495, 0.0
    %v784 = vmax.f32 %v498, 0.0
    %v785 = vmax.f32 %v500, 0.0
    %v786 = vmax.f32 %v503, 0.0
    %v787 = vmax.f32 %v505, 0.0
    %v788 = vmax.f32 %v508, 0.0
    %v789 = vmax.f32 %v510, 0.0
    %v790 = vmax.f32 %v513, 0.0
    %v791 = vmax.f32 %v515, 0.0
    %v792 = vmax.f32 %v518, 0.0
    %v793 = vmax.f32 %v520, 0.0
    %v794 = vmax.f32 %v523, 0.0
    %v795 = vmax.f32 %v525, 0.0
    %v796 = vmax.f32 %v528, 0.0
    %v797 = vmax.f32 %v530, 0.0
    %v798 = vmax.f32 %v533, 0.0
    %v799 = vmax.f32 %v535, 0.0
    %v800 = vmax.f32 %v538, 0.0
    %v801 = vmax.f32 %v540, 0.0
    %v802 = vmax.f32 %v543, 0.0
    %v803 = vmax.f32 %v545, 0.0
    %v804 = vmax.f32 %v548, 0.0
    %v805 = vmax.f32 %v550, 0.0
    %v806 = vmax.f32 %v553, 0.0
    %v807 = vmax.f32 %v555, 0.0
    %v808 = vmax.f32 %v558, 0.0
    %v809 = vmax.f32 %v560, 0.0
    %v810 = vmax.f32 %v563, 0.0
    %v811 = vmax.f32 %v565, 0.0
    %v812 = vmax.f32 %v568, 0.0
    %v813 = vmax.f32 %v570, 0.0
    %v814 = vmax.f32 %v573, 0.0
    %v815 = vmax.f32 %v575, 0.0
    %v816 = vmax.f32 %v578, 0.0
    %v817 = vmax.f32 %v580, 0.0
    %v818 = vmax.f32 %v583, 0.0
    %v819 = vmax.f32 %v585, 0.0
    %v820 = vmax.f32 %v588, 0.0
    %v821 = vmax.f32 %v590, 0.0
    %v822 = vmax.f32 %v593, 0.0
    %v823 = vmax.f32 %v595, 0.0
    %v824 = vmax.f32 %v598, 0.0
    %v825 = vmax.f32 %v600, 0.0
    %v826 = vmax.f32 %v603, 0.0
    %v827 = vmax.f32 %v605, 0.0
    %v828 = vmax.f32 %v608, 0.0
    %v829 = vmax.f32 %v610, 0.0
    %v830 = vmax.f32 %v613, 0.0
    %v831 = vmax.f32 %v615, 0.0
    %v832 = vmax.f32 %v618, 0.0
    %v833 = vmax.f32 %v620, 0.0
    %v834 = vmax.f32 %v623, 0.0
    %v835 = vmax.f32 %v625, 0.0
    %v836 = vmax.f32 %v628, 0.0
    %v837 = vmax.f32 %v630, 0.0
    %v838 = vmax.f32 %v633, 0.0
    %v839 = vmax.f32 %v635, 0.0
    %v840 = vmax.f32 %v638, 0.0
    %v841 = vmax.f32 %v640, 0.0
    %v842 = vmax.f32 %v643, 0.0
    %v843 = vmax.f32 %v645, 0.0
    %v844 = vmax.f32 %v648, 0.0
    %v845 = vmax.f32 %v650, 0.0
    %v846 = vmax.f32 %v653, 0.0
    %v847 = vmax.f32 %v655, 0.0
    %v848 = vmax.f32 %v658, 0.0
    %v849 = vmax.f32 %v660, 0.0
    %v850 = vmax.f32 %v663, 0.0
    %v851 = vmax.f32 %v665, 0.0
    %v852 = vmax.f32 %v668, 0.0
    %v853 = vmax.f32 %v670, 0.0
    %v854 = vmax.f32 %v673, 0.0
    %v855 = vmax.f32 %v675, 0.0
    %v856 = vmax.f32 %v678, 0.0
    %v857 = vmax.f32 %v680, 0.0
    %v858 = vmax.f32 %v683, 0.0
    %v859 = vmax.f32 %v685, 0.0
    %v860 = vmax.f32 %v688, 0.0
    %v861 = vmax.f32 %v690, 0.0
    %v862 = vmax.f32 %v693, 0.0
    %v863 = vmax.f32 %v695, 0.0
    %v864 = vmax.f32 %v698, 0.0
    %v865 = vmax.f32 %v700, 0.0
    %v866 = vmax.f32 %v703, 0.0
    %v867 = vmax.f32 %v705, 0.0
    %v868 = vmax.f32 %v708, 0.0
    %v869 = vmax.f32 %v710, 0.0
    %v870 = vmax.f32 %v713, 0.0
    %v871 = vmax.f32 %v715, 0.0
    %v872 = vmax.f32 %v718, 0.0
    %v873 = vmax.f32 %v720, 0.0
    %v874 = vmax.f32 %v723, 0.0
    %v875 = vmax.f32 %v725, 0.0
    %v876 = vmax.f32 %v728, 0.0
    %v877 = vmax.f32 %v730, 0.0
    %v878 = vmax.f32 %v733, 0.0
    %v879 = vmax.f32 %v735, 0.0
    %v880 = vmax.f32 %v738, 0.0
    %v881 = vmax.f32 %v740, 0.0
    %v882 = vmax.f32 %v743, 0.0
    %v883 = vmax.f32 %v745, 0.0
    %v884 = vmax.f32 %v748, 0.0
    %v885 = vmax.f32 %v750, 0.0
    %v886 = vmax.f32 %v753, 0.0
    %v887 = vmax.f32 %v755, 0.0
    %v888 = vmax.f32 %v758, 0.0
    %v889 = vmax.f32 %v760, 0.0
    %v890 = vpack.c.bf16 %v763, %v762
    %v891 = vpack.c.bf16 %v765, %v764
    %v892 = vpack.c.bf16 %v767, %v766
    %v893 = vpack.c.bf16 %v769, %v768
    %v894 = vpack.c.bf16 %v771, %v770
    %v895 = vpack.c.bf16 %v773, %v772
    %v896 = vpack.c.bf16 %v775, %v774
    %v897 = vpack.c.bf16 %v777, %v776
    %v898 = vpack.c.bf16 %v779, %v778
    %v899 = vpack.c.bf16 %v781, %v780
    %v900 = vpack.c.bf16 %v783, %v782
    %v901 = vpack.c.bf16 %v785, %v784
    %v902 = vpack.c.bf16 %v787, %v786
    %v903 = vpack.c.bf16 %v789, %v788
    %v904 = vpack.c.bf16 %v791, %v790
    %v905 = vpack.c.bf16 %v793, %v792
    %v906 = vpack.c.bf16 %v795, %v794
    %v907 = vpack.c.bf16 %v797, %v796
    %v908 = vpack.c.bf16 %v799, %v798
    %v909 = vpack.c.bf16 %v801, %v800
    %v910 = vpack.c.bf16 %v803, %v802
    %v911 = vpack.c.bf16 %v805, %v804
    %v912 = vpack.c.bf16 %v807, %v806
    %v913 = vpack.c.bf16 %v809, %v808
    %v914 = vpack.c.bf16 %v811, %v810
    %v915 = vpack.c.bf16 %v813, %v812
    %v916 = vpack.c.bf16 %v815, %v814
    %v917 = vpack.c.bf16 %v817, %v816
    %v918 = vpack.c.bf16 %v819, %v818
    %v919 = vpack.c.bf16 %v821, %v820
    %v920 = vpack.c.bf16 %v823, %v822
    %v921 = vpack.c.bf16 %v825, %v824
    %v922 = vpack.c.bf16 %v827, %v826
    %v923 = vpack.c.bf16 %v829, %v828
    %v924 = vpack.c.bf16 %v831, %v830
    %v925 = vpack.c.bf16 %v833, %v832
    %v926 = vpack.c.bf16 %v835, %v834
    %v927 = vpack.c.bf16 %v837, %v836
    %v928 = vpack.c.bf16 %v839, %v838
    %v929 = vpack.c.bf16 %v841, %v840
    %v930 = vpack.c.bf16 %v843, %v842
    %v931 = vpack.c.bf16 %v845, %v844
    %v932 = vpack.c.bf16 %v847, %v846
    %v933 = vpack.c.bf16 %v849, %v848
    %v934 = vpack.c.bf16 %v851, %v850
    %v935 = vpack.c.bf16 %v853, %v852
    %v936 = vpack.c.bf16 %v855, %v854
    %v937 = vpack.c.bf16 %v857, %v856
    %v938 = vpack.c.bf16 %v859, %v858
    %v939 = vpack.c.bf16 %v861, %v860
    %v940 = vpack.c.bf16 %v863, %v862
    %v941 = vpack.c.bf16 %v865, %v864
    %v942 = vpack.c.bf16 %v867, %v866
    %v943 = vpack.c.bf16 %v869, %v868
    %v944 = vpack.c.bf16 %v871, %v870
    %v945 = vpack.c.bf16 %v873, %v872
    %v946 = vpack.c.bf16 %v875, %v874
    %v947 = vpack.c.bf16 %v877, %v876
    %v948 = vpack.c.bf16 %v879, %v878
    %v949 = vpack.c.bf16 %v881, %v880
    %v950 = vpack.c.bf16 %v883, %v882
    %v951 = vpack.c.bf16 %v885, %v884
    %v952 = vpack.c.bf16 %v887, %v886
    %v953 = vpack.c.bf16 %v889, %v888
    %v954 = vld [vmem:[%s3] sm:$0xf]
    %v955 = vld [vmem:[%s3 + $0x4] sm:$0xf]
    %v956 = vld [vmem:[%s3 + $0x8] sm:$0xf]
    %v957 = vld [vmem:[%s3 + $0xc] sm:$0xf]
    %v958 = vld [vmem:[%s4] sm:$0x1]
    %v960 = vperm.slane %v958, 0
    %v966 = vunpack.c.l.b16 %v954
    %v967 = vunpack.c.l.b16 %v955
    %v968 = vunpack.c.l.b16 %v956
    %v969 = vunpack.c.l.b16 %v957
    %v970 = vpack.c.b16 %v967, %v966
    %v971 = vpack.c.b16 %v969, %v968
    %vm974 = vcmask 261120
    %v976 = vsel %vm974, %v890, 0
    %v979 = vsel %vm974, %v891, 0
    %v982 = vsel %vm974, %v892, 0
    %v985 = vsel %vm974, %v893, 0
    %v988 = vsel %vm974, %v894, 0
    %v991 = vsel %vm974, %v895, 0
    %v994 = vsel %vm974, %v896, 0
    %v997 = vsel %vm974, %v897, 0
    %v1000 = vsel %vm974, %v898, 0
    %v1003 = vsel %vm974, %v899, 0
    %v1006 = vsel %vm974, %v900, 0
    %v1009 = vsel %vm974, %v901, 0
    %v1012 = vsel %vm974, %v902, 0
    %v1015 = vsel %vm974, %v903, 0
    %v1018 = vsel %vm974, %v904, 0
    %v1021 = vsel %vm974, %v905, 0
    %v1024 = vsel %vm974, %v906, 0
    %v1027 = vsel %vm974, %v907, 0
    %v1030 = vsel %vm974, %v908, 0
    %v1033 = vsel %vm974, %v909, 0
    %v1036 = vsel %vm974, %v910, 0
    %v1039 = vsel %vm974, %v911, 0
    %v1042 = vsel %vm974, %v912, 0
    %v1045 = vsel %vm974, %v913, 0
    %v1048 = vsel %vm974, %v914, 0
    %v1051 = vsel %vm974, %v915, 0
    %v1054 = vsel %vm974, %v916, 0
    %v1057 = vsel %vm974, %v917, 0
    %v1060 = vsel %vm974, %v918, 0
    %v1063 = vsel %vm974, %v919, 0
    %v1066 = vsel %vm974, %v920, 0
    %v1069 = vsel %vm974, %v921, 0
    %v1072 = vsel %vm974, %v922, 0
    %v1075 = vsel %vm974, %v923, 0
    %v1078 = vsel %vm974, %v924, 0
    %v1081 = vsel %vm974, %v925, 0
    %v1084 = vsel %vm974, %v926, 0
    %v1087 = vsel %vm974, %v927, 0
    %v1090 = vsel %vm974, %v928, 0
    %v1093 = vsel %vm974, %v929, 0
    %v1096 = vsel %vm974, %v930, 0
    %v1099 = vsel %vm974, %v931, 0
    %v1102 = vsel %vm974, %v932, 0
    %v1105 = vsel %vm974, %v933, 0
    %v1108 = vsel %vm974, %v934, 0
    %v1111 = vsel %vm974, %v935, 0
    %v1114 = vsel %vm974, %v936, 0
    %v1117 = vsel %vm974, %v937, 0
    %v1120 = vsel %vm974, %v938, 0
    %v1123 = vsel %vm974, %v939, 0
    %v1126 = vsel %vm974, %v940, 0
    %v1129 = vsel %vm974, %v941, 0
    %v1132 = vsel %vm974, %v942, 0
    %v1135 = vsel %vm974, %v943, 0
    %v1138 = vsel %vm974, %v944, 0
    %v1141 = vsel %vm974, %v945, 0
    %v1144 = vsel %vm974, %v946, 0
    %v1147 = vsel %vm974, %v947, 0
    %v1150 = vsel %vm974, %v948, 0
    %v1153 = vsel %vm974, %v949, 0
    %v1156 = vsel %vm974, %v950, 0
    %v1159 = vsel %vm974, %v951, 0
    %v1162 = vsel %vm974, %v952, 0
    %v1165 = vsel %vm974, %v953, 0
    %1167 = vmatpush.bf16.msra.mxu0 0
    %1168 = vmatpush.bf16.msra.mxu0 0
    %1169 = vmatpush.bf16.msra.mxu0 0
    %1170 = vmatpush.bf16.msra.mxu0 0
    %1171 = vmatpush.bf16.msra.mxu0 0
    %1172 = vmatpush.bf16.msra.mxu0 0
    %1173 = vmatpush.bf16.msra.mxu0 %v971
    %1174 = vmatpush.bf16.msra.mxu0 %v970
    %1175 = vmatmul.bf16.gmra.mxu0 %v976
    %v1176 = vpop.f32.mrf.mxu0
    %v1177 = vadd.f32 %v960, %v1176
    %v1178 = vpop.f32.mrf.mxu0
    %v1179 = vadd.f32 %v960, %v1178
    %1180 = vmatmul.bf16.gmra.mxu0 %v979
    %v1181 = vpop.f32.mrf.mxu0
    %v1182 = vadd.f32 %v960, %v1181
    %v1183 = vpop.f32.mrf.mxu0
    %v1184 = vadd.f32 %v960, %v1183
    %1185 = vmatmul.bf16.gmra.mxu0 %v982
    %v1186 = vpop.f32.mrf.mxu0
    %v1187 = vadd.f32 %v960, %v1186
    %v1188 = vpop.f32.mrf.mxu0
    %v1189 = vadd.f32 %v960, %v1188
    %1190 = vmatmul.bf16.gmra.mxu0 %v985
    %v1191 = vpop.f32.mrf.mxu0
    %v1192 = vadd.f32 %v960, %v1191
    %v1193 = vpop.f32.mrf.mxu0
    %v1194 = vadd.f32 %v960, %v1193
    %1195 = vmatmul.bf16.gmra.mxu0 %v988
    %v1196 = vpop.f32.mrf.mxu0
    %v1197 = vadd.f32 %v960, %v1196
    %v1198 = vpop.f32.mrf.mxu0
    %v1199 = vadd.f32 %v960, %v1198
    %1200 = vmatmul.bf16.gmra.mxu0 %v991
    %v1201 = vpop.f32.mrf.mxu0
    %v1202 = vadd.f32 %v960, %v1201
    %v1203 = vpop.f32.mrf.mxu0
    %v1204 = vadd.f32 %v960, %v1203
    %1205 = vmatmul.bf16.gmra.mxu0 %v994
    %v1206 = vpop.f32.mrf.mxu0
    %v1207 = vadd.f32 %v960, %v1206
    %v1208 = vpop.f32.mrf.mxu0
    %v1209 = vadd.f32 %v960, %v1208
    %1210 = vmatmul.bf16.gmra.mxu0 %v997
    %v1211 = vpop.f32.mrf.mxu0
    %v1212 = vadd.f32 %v960, %v1211
    %v1213 = vpop.f32.mrf.mxu0
    %v1214 = vadd.f32 %v960, %v1213
    %1215 = vmatmul.bf16.gmra.mxu0 %v1000
    %v1216 = vpop.f32.mrf.mxu0
    %v1217 = vadd.f32 %v960, %v1216
    %v1218 = vpop.f32.mrf.mxu0
    %v1219 = vadd.f32 %v960, %v1218
    %1220 = vmatmul.bf16.gmra.mxu0 %v1003
    %v1221 = vpop.f32.mrf.mxu0
    %v1222 = vadd.f32 %v960, %v1221
    %v1223 = vpop.f32.mrf.mxu0
    %v1224 = vadd.f32 %v960, %v1223
    %1225 = vmatmul.bf16.gmra.mxu0 %v1006
    %v1226 = vpop.f32.mrf.mxu0
    %v1227 = vadd.f32 %v960, %v1226
    %v1228 = vpop.f32.mrf.mxu0
    %v1229 = vadd.f32 %v960, %v1228
    %1230 = vmatmul.bf16.gmra.mxu0 %v1009
    %v1231 = vpop.f32.mrf.mxu0
    %v1232 = vadd.f32 %v960, %v1231
    %v1233 = vpop.f32.mrf.mxu0
    %v1234 = vadd.f32 %v960, %v1233
    %1235 = vmatmul.bf16.gmra.mxu0 %v1012
    %v1236 = vpop.f32.mrf.mxu0
    %v1237 = vadd.f32 %v960, %v1236
    %v1238 = vpop.f32.mrf.mxu0
    %v1239 = vadd.f32 %v960, %v1238
    %1240 = vmatmul.bf16.gmra.mxu0 %v1015
    %v1241 = vpop.f32.mrf.mxu0
    %v1242 = vadd.f32 %v960, %v1241
    %v1243 = vpop.f32.mrf.mxu0
    %v1244 = vadd.f32 %v960, %v1243
    %1245 = vmatmul.bf16.gmra.mxu0 %v1018
    %v1246 = vpop.f32.mrf.mxu0
    %v1247 = vadd.f32 %v960, %v1246
    %v1248 = vpop.f32.mrf.mxu0
    %v1249 = vadd.f32 %v960, %v1248
    %1250 = vmatmul.bf16.gmra.mxu0 %v1021
    %v1251 = vpop.f32.mrf.mxu0
    %v1252 = vadd.f32 %v960, %v1251
    %v1253 = vpop.f32.mrf.mxu0
    %v1254 = vadd.f32 %v960, %v1253
    %1255 = vmatmul.bf16.gmra.mxu0 %v1024
    %v1256 = vpop.f32.mrf.mxu0
    %v1257 = vadd.f32 %v960, %v1256
    %v1258 = vpop.f32.mrf.mxu0
    %v1259 = vadd.f32 %v960, %v1258
    %1260 = vmatmul.bf16.gmra.mxu0 %v1027
    %v1261 = vpop.f32.mrf.mxu0
    %v1262 = vadd.f32 %v960, %v1261
    %v1263 = vpop.f32.mrf.mxu0
    %v1264 = vadd.f32 %v960, %v1263
    %1265 = vmatmul.bf16.gmra.mxu0 %v1030
    %v1266 = vpop.f32.mrf.mxu0
    %v1267 = vadd.f32 %v960, %v1266
    %v1268 = vpop.f32.mrf.mxu0
    %v1269 = vadd.f32 %v960, %v1268
    %1270 = vmatmul.bf16.gmra.mxu0 %v1033
    %v1271 = vpop.f32.mrf.mxu0
    %v1272 = vadd.f32 %v960, %v1271
    %v1273 = vpop.f32.mrf.mxu0
    %v1274 = vadd.f32 %v960, %v1273
    %1275 = vmatmul.bf16.gmra.mxu0 %v1036
    %v1276 = vpop.f32.mrf.mxu0
    %v1277 = vadd.f32 %v960, %v1276
    %v1278 = vpop.f32.mrf.mxu0
    %v1279 = vadd.f32 %v960, %v1278
    %1280 = vmatmul.bf16.gmra.mxu0 %v1039
    %v1281 = vpop.f32.mrf.mxu0
    %v1282 = vadd.f32 %v960, %v1281
    %v1283 = vpop.f32.mrf.mxu0
    %v1284 = vadd.f32 %v960, %v1283
    %1285 = vmatmul.bf16.gmra.mxu0 %v1042
    %v1286 = vpop.f32.mrf.mxu0
    %v1287 = vadd.f32 %v960, %v1286
    %v1288 = vpop.f32.mrf.mxu0
    %v1289 = vadd.f32 %v960, %v1288
    %1290 = vmatmul.bf16.gmra.mxu0 %v1045
    %v1291 = vpop.f32.mrf.mxu0
    %v1292 = vadd.f32 %v960, %v1291
    %v1293 = vpop.f32.mrf.mxu0
    %v1294 = vadd.f32 %v960, %v1293
    %1295 = vmatmul.bf16.gmra.mxu0 %v1048
    %v1296 = vpop.f32.mrf.mxu0
    %v1297 = vadd.f32 %v960, %v1296
    %v1298 = vpop.f32.mrf.mxu0
    %v1299 = vadd.f32 %v960, %v1298
    %1300 = vmatmul.bf16.gmra.mxu0 %v1051
    %v1301 = vpop.f32.mrf.mxu0
    %v1302 = vadd.f32 %v960, %v1301
    %v1303 = vpop.f32.mrf.mxu0
    %v1304 = vadd.f32 %v960, %v1303
    %1305 = vmatmul.bf16.gmra.mxu0 %v1054
    %v1306 = vpop.f32.mrf.mxu0
    %v1307 = vadd.f32 %v960, %v1306
    %v1308 = vpop.f32.mrf.mxu0
    %v1309 = vadd.f32 %v960, %v1308
    %1310 = vmatmul.bf16.gmra.mxu0 %v1057
    %v1311 = vpop.f32.mrf.mxu0
    %v1312 = vadd.f32 %v960, %v1311
    %v1313 = vpop.f32.mrf.mxu0
    %v1314 = vadd.f32 %v960, %v1313
    %1315 = vmatmul.bf16.gmra.mxu0 %v1060
    %v1316 = vpop.f32.mrf.mxu0
    %v1317 = vadd.f32 %v960, %v1316
    %v1318 = vpop.f32.mrf.mxu0
    %v1319 = vadd.f32 %v960, %v1318
    %1320 = vmatmul.bf16.gmra.mxu0 %v1063
    %v1321 = vpop.f32.mrf.mxu0
    %v1322 = vadd.f32 %v960, %v1321
    %v1323 = vpop.f32.mrf.mxu0
    %v1324 = vadd.f32 %v960, %v1323
    %1325 = vmatmul.bf16.gmra.mxu0 %v1066
    %v1326 = vpop.f32.mrf.mxu0
    %v1327 = vadd.f32 %v960, %v1326
    %v1328 = vpop.f32.mrf.mxu0
    %v1329 = vadd.f32 %v960, %v1328
    %1330 = vmatmul.bf16.gmra.mxu0 %v1069
    %v1331 = vpop.f32.mrf.mxu0
    %v1332 = vadd.f32 %v960, %v1331
    %v1333 = vpop.f32.mrf.mxu0
    %v1334 = vadd.f32 %v960, %v1333
    %1335 = vmatmul.bf16.gmra.mxu0 %v1072
    %v1336 = vpop.f32.mrf.mxu0
    %v1337 = vadd.f32 %v960, %v1336
    %v1338 = vpop.f32.mrf.mxu0
    %v1339 = vadd.f32 %v960, %v1338
    %1340 = vmatmul.bf16.gmra.mxu0 %v1075
    %v1341 = vpop.f32.mrf.mxu0
    %v1342 = vadd.f32 %v960, %v1341
    %v1343 = vpop.f32.mrf.mxu0
    %v1344 = vadd.f32 %v960, %v1343
    %1345 = vmatmul.bf16.gmra.mxu0 %v1078
    %v1346 = vpop.f32.mrf.mxu0
    %v1347 = vadd.f32 %v960, %v1346
    %v1348 = vpop.f32.mrf.mxu0
    %v1349 = vadd.f32 %v960, %v1348
    %1350 = vmatmul.bf16.gmra.mxu0 %v1081
    %v1351 = vpop.f32.mrf.mxu0
    %v1352 = vadd.f32 %v960, %v1351
    %v1353 = vpop.f32.mrf.mxu0
    %v1354 = vadd.f32 %v960, %v1353
    %1355 = vmatmul.bf16.gmra.mxu0 %v1084
    %v1356 = vpop.f32.mrf.mxu0
    %v1357 = vadd.f32 %v960, %v1356
    %v1358 = vpop.f32.mrf.mxu0
    %v1359 = vadd.f32 %v960, %v1358
    %1360 = vmatmul.bf16.gmra.mxu0 %v1087
    %v1361 = vpop.f32.mrf.mxu0
    %v1362 = vadd.f32 %v960, %v1361
    %v1363 = vpop.f32.mrf.mxu0
    %v1364 = vadd.f32 %v960, %v1363
    %1365 = vmatmul.bf16.gmra.mxu0 %v1090
    %v1366 = vpop.f32.mrf.mxu0
    %v1367 = vadd.f32 %v960, %v1366
    %v1368 = vpop.f32.mrf.mxu0
    %v1369 = vadd.f32 %v960, %v1368
    %1370 = vmatmul.bf16.gmra.mxu0 %v1093
    %v1371 = vpop.f32.mrf.mxu0
    %v1372 = vadd.f32 %v960, %v1371
    %v1373 = vpop.f32.mrf.mxu0
    %v1374 = vadd.f32 %v960, %v1373
    %1375 = vmatmul.bf16.gmra.mxu0 %v1096
    %v1376 = vpop.f32.mrf.mxu0
    %v1377 = vadd.f32 %v960, %v1376
    %v1378 = vpop.f32.mrf.mxu0
    %v1379 = vadd.f32 %v960, %v1378
    %1380 = vmatmul.bf16.gmra.mxu0 %v1099
    %v1381 = vpop.f32.mrf.mxu0
    %v1382 = vadd.f32 %v960, %v1381
    %v1383 = vpop.f32.mrf.mxu0
    %v1384 = vadd.f32 %v960, %v1383
    %1385 = vmatmul.bf16.gmra.mxu0 %v1102
    %v1386 = vpop.f32.mrf.mxu0
    %v1387 = vadd.f32 %v960, %v1386
    %v1388 = vpop.f32.mrf.mxu0
    %v1389 = vadd.f32 %v960, %v1388
    %1390 = vmatmul.bf16.gmra.mxu0 %v1105
    %v1391 = vpop.f32.mrf.mxu0
    %v1392 = vadd.f32 %v960, %v1391
    %v1393 = vpop.f32.mrf.mxu0
    %v1394 = vadd.f32 %v960, %v1393
    %1395 = vmatmul.bf16.gmra.mxu0 %v1108
    %v1396 = vpop.f32.mrf.mxu0
    %v1397 = vadd.f32 %v960, %v1396
    %v1398 = vpop.f32.mrf.mxu0
    %v1399 = vadd.f32 %v960, %v1398
    %1400 = vmatmul.bf16.gmra.mxu0 %v1111
    %v1401 = vpop.f32.mrf.mxu0
    %v1402 = vadd.f32 %v960, %v1401
    %v1403 = vpop.f32.mrf.mxu0
    %v1404 = vadd.f32 %v960, %v1403
    %1405 = vmatmul.bf16.gmra.mxu0 %v1114
    %v1406 = vpop.f32.mrf.mxu0
    %v1407 = vadd.f32 %v960, %v1406
    %v1408 = vpop.f32.mrf.mxu0
    %v1409 = vadd.f32 %v960, %v1408
    %1410 = vmatmul.bf16.gmra.mxu0 %v1117
    %v1411 = vpop.f32.mrf.mxu0
    %v1412 = vadd.f32 %v960, %v1411
    %v1413 = vpop.f32.mrf.mxu0
    %v1414 = vadd.f32 %v960, %v1413
    %1415 = vmatmul.bf16.gmra.mxu0 %v1120
    %v1416 = vpop.f32.mrf.mxu0
    %v1417 = vadd.f32 %v960, %v1416
    %v1418 = vpop.f32.mrf.mxu0
    %v1419 = vadd.f32 %v960, %v1418
    %1420 = vmatmul.bf16.gmra.mxu0 %v1123
    %v1421 = vpop.f32.mrf.mxu0
    %v1422 = vadd.f32 %v960, %v1421
    %v1423 = vpop.f32.mrf.mxu0
    %v1424 = vadd.f32 %v960, %v1423
    %1425 = vmatmul.bf16.gmra.mxu0 %v1126
    %v1426 = vpop.f32.mrf.mxu0
    %v1427 = vadd.f32 %v960, %v1426
    %v1428 = vpop.f32.mrf.mxu0
    %v1429 = vadd.f32 %v960, %v1428
    %1430 = vmatmul.bf16.gmra.mxu0 %v1129
    %v1431 = vpop.f32.mrf.mxu0
    %v1432 = vadd.f32 %v960, %v1431
    %v1433 = vpop.f32.mrf.mxu0
    %v1434 = vadd.f32 %v960, %v1433
    %1435 = vmatmul.bf16.gmra.mxu0 %v1132
    %v1436 = vpop.f32.mrf.mxu0
    %v1437 = vadd.f32 %v960, %v1436
    %v1438 = vpop.f32.mrf.mxu0
    %v1439 = vadd.f32 %v960, %v1438
    %1440 = vmatmul.bf16.gmra.mxu0 %v1135
    %v1441 = vpop.f32.mrf.mxu0
    %v1442 = vadd.f32 %v960, %v1441
    %v1443 = vpop.f32.mrf.mxu0
    %v1444 = vadd.f32 %v960, %v1443
    %1445 = vmatmul.bf16.gmra.mxu0 %v1138
    %v1446 = vpop.f32.mrf.mxu0
    %v1447 = vadd.f32 %v960, %v1446
    %v1448 = vpop.f32.mrf.mxu0
    %v1449 = vadd.f32 %v960, %v1448
    %1450 = vmatmul.bf16.gmra.mxu0 %v1141
    %v1451 = vpop.f32.mrf.mxu0
    %v1452 = vadd.f32 %v960, %v1451
    %v1453 = vpop.f32.mrf.mxu0
    %v1454 = vadd.f32 %v960, %v1453
    %1455 = vmatmul.bf16.gmra.mxu0 %v1144
    %v1456 = vpop.f32.mrf.mxu0
    %v1457 = vadd.f32 %v960, %v1456
    %v1458 = vpop.f32.mrf.mxu0
    %v1459 = vadd.f32 %v960, %v1458
    %1460 = vmatmul.bf16.gmra.mxu0 %v1147
    %v1461 = vpop.f32.mrf.mxu0
    %v1462 = vadd.f32 %v960, %v1461
    %v1463 = vpop.f32.mrf.mxu0
    %v1464 = vadd.f32 %v960, %v1463
    %1465 = vmatmul.bf16.gmra.mxu0 %v1150
    %v1466 = vpop.f32.mrf.mxu0
    %v1467 = vadd.f32 %v960, %v1466
    %v1468 = vpop.f32.mrf.mxu0
    %v1469 = vadd.f32 %v960, %v1468
    %1470 = vmatmul.bf16.gmra.mxu0 %v1153
    %v1471 = vpop.f32.mrf.mxu0
    %v1472 = vadd.f32 %v960, %v1471
    %v1473 = vpop.f32.mrf.mxu0
    %v1474 = vadd.f32 %v960, %v1473
    %1475 = vmatmul.bf16.gmra.mxu0 %v1156
    %v1476 = vpop.f32.mrf.mxu0
    %v1477 = vadd.f32 %v960, %v1476
    %v1478 = vpop.f32.mrf.mxu0
    %v1479 = vadd.f32 %v960, %v1478
    %1480 = vmatmul.bf16.gmra.mxu0 %v1159
    %v1481 = vpop.f32.mrf.mxu0
    %v1482 = vadd.f32 %v960, %v1481
    %v1483 = vpop.f32.mrf.mxu0
    %v1484 = vadd.f32 %v960, %v1483
    %1485 = vmatmul.bf16.gmra.mxu0 %v1162
    %v1486 = vpop.f32.mrf.mxu0
    %v1487 = vadd.f32 %v960, %v1486
    %v1488 = vpop.f32.mrf.mxu0
    %v1489 = vadd.f32 %v960, %v1488
    %1490 = vmatmul.bf16.gmra.mxu0 %v1165
    %v1491 = vpop.f32.mrf.mxu0
    %v1492 = vadd.f32 %v960, %v1491
    %v1493 = vpop.f32.mrf.mxu0
    %v1494 = vadd.f32 %v960, %v1493
    %1495 = vdwg.mxu0
    %v1496 = vmax.f32 %v1177, 0.0
    %v1497 = vmax.f32 %v1179, 0.0
    %v1498 = vmax.f32 %v1182, 0.0
    %v1499 = vmax.f32 %v1184, 0.0
    %v1500 = vmax.f32 %v1187, 0.0
    %v1501 = vmax.f32 %v1189, 0.0
    %v1502 = vmax.f32 %v1192, 0.0
    %v1503 = vmax.f32 %v1194, 0.0
    %v1504 = vmax.f32 %v1197, 0.0
    %v1505 = vmax.f32 %v1199, 0.0
    %v1506 = vmax.f32 %v1202, 0.0
    %v1507 = vmax.f32 %v1204, 0.0
    %v1508 = vmax.f32 %v1207, 0.0
    %v1509 = vmax.f32 %v1209, 0.0
    %v1510 = vmax.f32 %v1212, 0.0
    %v1511 = vmax.f32 %v1214, 0.0
    %v1512 = vmax.f32 %v1217, 0.0
    %v1513 = vmax.f32 %v1219, 0.0
    %v1514 = vmax.f32 %v1222, 0.0
    %v1515 = vmax.f32 %v1224, 0.0
    %v1516 = vmax.f32 %v1227, 0.0
    %v1517 = vmax.f32 %v1229, 0.0
    %v1518 = vmax.f32 %v1232, 0.0
    %v1519 = vmax.f32 %v1234, 0.0
    %v1520 = vmax.f32 %v1237, 0.0
    %v1521 = vmax.f32 %v1239, 0.0
    %v1522 = vmax.f32 %v1242, 0.0
    %v1523 = vmax.f32 %v1244, 0.0
    %v1524 = vmax.f32 %v1247, 0.0
    %v1525 = vmax.f32 %v1249, 0.0
    %v1526 = vmax.f32 %v1252, 0.0
    %v1527 = vmax.f32 %v1254, 0.0
    %v1528 = vmax.f32 %v1257, 0.0
    %v1529 = vmax.f32 %v1259, 0.0
    %v1530 = vmax.f32 %v1262, 0.0
    %v1531 = vmax.f32 %v1264, 0.0
    %v1532 = vmax.f32 %v1267, 0.0
    %v1533 = vmax.f32 %v1269, 0.0
    %v1534 = vmax.f32 %v1272, 0.0
    %v1535 = vmax.f32 %v1274, 0.0
    %v1536 = vmax.f32 %v1277, 0.0
    %v1537 = vmax.f32 %v1279, 0.0
    %v1538 = vmax.f32 %v1282, 0.0
    %v1539 = vmax.f32 %v1284, 0.0
    %v1540 = vmax.f32 %v1287, 0.0
    %v1541 = vmax.f32 %v1289, 0.0
    %v1542 = vmax.f32 %v1292, 0.0
    %v1543 = vmax.f32 %v1294, 0.0
    %v1544 = vmax.f32 %v1297, 0.0
    %v1545 = vmax.f32 %v1299, 0.0
    %v1546 = vmax.f32 %v1302, 0.0
    %v1547 = vmax.f32 %v1304, 0.0
    %v1548 = vmax.f32 %v1307, 0.0
    %v1549 = vmax.f32 %v1309, 0.0
    %v1550 = vmax.f32 %v1312, 0.0
    %v1551 = vmax.f32 %v1314, 0.0
    %v1552 = vmax.f32 %v1317, 0.0
    %v1553 = vmax.f32 %v1319, 0.0
    %v1554 = vmax.f32 %v1322, 0.0
    %v1555 = vmax.f32 %v1324, 0.0
    %v1556 = vmax.f32 %v1327, 0.0
    %v1557 = vmax.f32 %v1329, 0.0
    %v1558 = vmax.f32 %v1332, 0.0
    %v1559 = vmax.f32 %v1334, 0.0
    %v1560 = vmax.f32 %v1337, 0.0
    %v1561 = vmax.f32 %v1339, 0.0
    %v1562 = vmax.f32 %v1342, 0.0
    %v1563 = vmax.f32 %v1344, 0.0
    %v1564 = vmax.f32 %v1347, 0.0
    %v1565 = vmax.f32 %v1349, 0.0
    %v1566 = vmax.f32 %v1352, 0.0
    %v1567 = vmax.f32 %v1354, 0.0
    %v1568 = vmax.f32 %v1357, 0.0
    %v1569 = vmax.f32 %v1359, 0.0
    %v1570 = vmax.f32 %v1362, 0.0
    %v1571 = vmax.f32 %v1364, 0.0
    %v1572 = vmax.f32 %v1367, 0.0
    %v1573 = vmax.f32 %v1369, 0.0
    %v1574 = vmax.f32 %v1372, 0.0
    %v1575 = vmax.f32 %v1374, 0.0
    %v1576 = vmax.f32 %v1377, 0.0
    %v1577 = vmax.f32 %v1379, 0.0
    %v1578 = vmax.f32 %v1382, 0.0
    %v1579 = vmax.f32 %v1384, 0.0
    %v1580 = vmax.f32 %v1387, 0.0
    %v1581 = vmax.f32 %v1389, 0.0
    %v1582 = vmax.f32 %v1392, 0.0
    %v1583 = vmax.f32 %v1394, 0.0
    %v1584 = vmax.f32 %v1397, 0.0
    %v1585 = vmax.f32 %v1399, 0.0
    %v1586 = vmax.f32 %v1402, 0.0
    %v1587 = vmax.f32 %v1404, 0.0
    %v1588 = vmax.f32 %v1407, 0.0
    %v1589 = vmax.f32 %v1409, 0.0
    %v1590 = vmax.f32 %v1412, 0.0
    %v1591 = vmax.f32 %v1414, 0.0
    %v1592 = vmax.f32 %v1417, 0.0
    %v1593 = vmax.f32 %v1419, 0.0
    %v1594 = vmax.f32 %v1422, 0.0
    %v1595 = vmax.f32 %v1424, 0.0
    %v1596 = vmax.f32 %v1427, 0.0
    %v1597 = vmax.f32 %v1429, 0.0
    %v1598 = vmax.f32 %v1432, 0.0
    %v1599 = vmax.f32 %v1434, 0.0
    %v1600 = vmax.f32 %v1437, 0.0
    %v1601 = vmax.f32 %v1439, 0.0
    %v1602 = vmax.f32 %v1442, 0.0
    %v1603 = vmax.f32 %v1444, 0.0
    %v1604 = vmax.f32 %v1447, 0.0
    %v1605 = vmax.f32 %v1449, 0.0
    %v1606 = vmax.f32 %v1452, 0.0
    %v1607 = vmax.f32 %v1454, 0.0
    %v1608 = vmax.f32 %v1457, 0.0
    %v1609 = vmax.f32 %v1459, 0.0
    %v1610 = vmax.f32 %v1462, 0.0
    %v1611 = vmax.f32 %v1464, 0.0
    %v1612 = vmax.f32 %v1467, 0.0
    %v1613 = vmax.f32 %v1469, 0.0
    %v1614 = vmax.f32 %v1472, 0.0
    %v1615 = vmax.f32 %v1474, 0.0
    %v1616 = vmax.f32 %v1477, 0.0
    %v1617 = vmax.f32 %v1479, 0.0
    %v1618 = vmax.f32 %v1482, 0.0
    %v1619 = vmax.f32 %v1484, 0.0
    %v1620 = vmax.f32 %v1487, 0.0
    %v1621 = vmax.f32 %v1489, 0.0
    %v1622 = vmax.f32 %v1492, 0.0
    %v1623 = vmax.f32 %v1494, 0.0
    %v1624 = vpack.c.bf16 %v1497, %v1496
    %v1625 = vpack.c.bf16 %v1499, %v1498
    %v1626 = vpack.c.bf16 %v1501, %v1500
    %v1627 = vpack.c.bf16 %v1503, %v1502
    %v1628 = vpack.c.bf16 %v1505, %v1504
    %v1629 = vpack.c.bf16 %v1507, %v1506
    %v1630 = vpack.c.bf16 %v1509, %v1508
    %v1631 = vpack.c.bf16 %v1511, %v1510
    %v1632 = vpack.c.bf16 %v1513, %v1512
    %v1633 = vpack.c.bf16 %v1515, %v1514
    %v1634 = vpack.c.bf16 %v1517, %v1516
    %v1635 = vpack.c.bf16 %v1519, %v1518
    %v1636 = vpack.c.bf16 %v1521, %v1520
    %v1637 = vpack.c.bf16 %v1523, %v1522
    %v1638 = vpack.c.bf16 %v1525, %v1524
    %v1639 = vpack.c.bf16 %v1527, %v1526
    %v1640 = vpack.c.bf16 %v1529, %v1528
    %v1641 = vpack.c.bf16 %v1531, %v1530
    %v1642 = vpack.c.bf16 %v1533, %v1532
    %v1643 = vpack.c.bf16 %v1535, %v1534
    %v1644 = vpack.c.bf16 %v1537, %v1536
    %v1645 = vpack.c.bf16 %v1539, %v1538
    %v1646 = vpack.c.bf16 %v1541, %v1540
    %v1647 = vpack.c.bf16 %v1543, %v1542
    %v1648 = vpack.c.bf16 %v1545, %v1544
    %v1649 = vpack.c.bf16 %v1547, %v1546
    %v1650 = vpack.c.bf16 %v1549, %v1548
    %v1651 = vpack.c.bf16 %v1551, %v1550
    %v1652 = vpack.c.bf16 %v1553, %v1552
    %v1653 = vpack.c.bf16 %v1555, %v1554
    %v1654 = vpack.c.bf16 %v1557, %v1556
    %v1655 = vpack.c.bf16 %v1559, %v1558
    %v1656 = vpack.c.bf16 %v1561, %v1560
    %v1657 = vpack.c.bf16 %v1563, %v1562
    %v1658 = vpack.c.bf16 %v1565, %v1564
    %v1659 = vpack.c.bf16 %v1567, %v1566
    %v1660 = vpack.c.bf16 %v1569, %v1568
    %v1661 = vpack.c.bf16 %v1571, %v1570
    %v1662 = vpack.c.bf16 %v1573, %v1572
    %v1663 = vpack.c.bf16 %v1575, %v1574
    %v1664 = vpack.c.bf16 %v1577, %v1576
    %v1665 = vpack.c.bf16 %v1579, %v1578
    %v1666 = vpack.c.bf16 %v1581, %v1580
    %v1667 = vpack.c.bf16 %v1583, %v1582
    %v1668 = vpack.c.bf16 %v1585, %v1584
    %v1669 = vpack.c.bf16 %v1587, %v1586
    %v1670 = vpack.c.bf16 %v1589, %v1588
    %v1671 = vpack.c.bf16 %v1591, %v1590
    %v1672 = vpack.c.bf16 %v1593, %v1592
    %v1673 = vpack.c.bf16 %v1595, %v1594
    %v1674 = vpack.c.bf16 %v1597, %v1596
    %v1675 = vpack.c.bf16 %v1599, %v1598
    %v1676 = vpack.c.bf16 %v1601, %v1600
    %v1677 = vpack.c.bf16 %v1603, %v1602
    %v1678 = vpack.c.bf16 %v1605, %v1604
    %v1679 = vpack.c.bf16 %v1607, %v1606
    %v1680 = vpack.c.bf16 %v1609, %v1608
    %v1681 = vpack.c.bf16 %v1611, %v1610
    %v1682 = vpack.c.bf16 %v1613, %v1612
    %v1683 = vpack.c.bf16 %v1615, %v1614
    %v1684 = vpack.c.bf16 %v1617, %v1616
    %v1685 = vpack.c.bf16 %v1619, %v1618
    %v1686 = vpack.c.bf16 %v1621, %v1620
    %v1687 = vpack.c.bf16 %v1623, %v1622
    %v1688 = vld [vmem:[%s5] sm:$0xf]
    %v1689 = vld [vmem:[%s5 + $0x4] sm:$0xf]
    %v1692 = vunpack.c.l.b16 %v1688
    %v1693 = vunpack.c.l.b16 %v1689
    %v1694 = vpack.c.b16 %v1693, %v1692
    %vm1696 = vcmask 130048
    %v1698 = vsel %vm1696, %v1624, 0
    %v1701 = vsel %vm1696, %v1625, 0
    %v1704 = vsel %vm1696, %v1626, 0
    %v1707 = vsel %vm1696, %v1627, 0
    %v1710 = vsel %vm1696, %v1628, 0
    %v1713 = vsel %vm1696, %v1629, 0
    %v1716 = vsel %vm1696, %v1630, 0
    %v1719 = vsel %vm1696, %v1631, 0
    %v1722 = vsel %vm1696, %v1632, 0
    %v1725 = vsel %vm1696, %v1633, 0
    %v1728 = vsel %vm1696, %v1634, 0
    %v1731 = vsel %vm1696, %v1635, 0
    %v1734 = vsel %vm1696, %v1636, 0
    %v1737 = vsel %vm1696, %v1637, 0
    %v1740 = vsel %vm1696, %v1638, 0
    %v1743 = vsel %vm1696, %v1639, 0
    %v1746 = vsel %vm1696, %v1640, 0
    %v1749 = vsel %vm1696, %v1641, 0
    %v1752 = vsel %vm1696, %v1642, 0
    %v1755 = vsel %vm1696, %v1643, 0
    %v1758 = vsel %vm1696, %v1644, 0
    %v1761 = vsel %vm1696, %v1645, 0
    %v1764 = vsel %vm1696, %v1646, 0
    %v1767 = vsel %vm1696, %v1647, 0
    %v1770 = vsel %vm1696, %v1648, 0
    %v1773 = vsel %vm1696, %v1649, 0
    %v1776 = vsel %vm1696, %v1650, 0
    %v1779 = vsel %vm1696, %v1651, 0
    %v1782 = vsel %vm1696, %v1652, 0
    %v1785 = vsel %vm1696, %v1653, 0
    %v1788 = vsel %vm1696, %v1654, 0
    %v1791 = vsel %vm1696, %v1655, 0
    %v1794 = vsel %vm1696, %v1656, 0
    %v1797 = vsel %vm1696, %v1657, 0
    %v1800 = vsel %vm1696, %v1658, 0
    %v1803 = vsel %vm1696, %v1659, 0
    %v1806 = vsel %vm1696, %v1660, 0
    %v1809 = vsel %vm1696, %v1661, 0
    %v1812 = vsel %vm1696, %v1662, 0
    %v1815 = vsel %vm1696, %v1663, 0
    %v1818 = vsel %vm1696, %v1664, 0
    %v1821 = vsel %vm1696, %v1665, 0
    %v1824 = vsel %vm1696, %v1666, 0
    %v1827 = vsel %vm1696, %v1667, 0
    %v1830 = vsel %vm1696, %v1668, 0
    %v1833 = vsel %vm1696, %v1669, 0
    %v1836 = vsel %vm1696, %v1670, 0
    %v1839 = vsel %vm1696, %v1671, 0
    %v1842 = vsel %vm1696, %v1672, 0
    %v1845 = vsel %vm1696, %v1673, 0
    %v1848 = vsel %vm1696, %v1674, 0
    %v1851 = vsel %vm1696, %v1675, 0
    %v1854 = vsel %vm1696, %v1676, 0
    %v1857 = vsel %vm1696, %v1677, 0
    %v1860 = vsel %vm1696, %v1678, 0
    %v1863 = vsel %vm1696, %v1679, 0
    %v1866 = vsel %vm1696, %v1680, 0
    %v1869 = vsel %vm1696, %v1681, 0
    %v1872 = vsel %vm1696, %v1682, 0
    %v1875 = vsel %vm1696, %v1683, 0
    %v1878 = vsel %vm1696, %v1684, 0
    %v1881 = vsel %vm1696, %v1685, 0
    %v1884 = vsel %vm1696, %v1686, 0
    %v1887 = vsel %vm1696, %v1687, 0
    %1889 = vmatpush.bf16.msra.mxu0 0
    %1890 = vmatpush.bf16.msra.mxu0 0
    %1891 = vmatpush.bf16.msra.mxu0 0
    %1892 = vmatpush.bf16.msra.mxu0 0
    %1893 = vmatpush.bf16.msra.mxu0 0
    %1894 = vmatpush.bf16.msra.mxu0 0
    %1895 = vmatpush.bf16.msra.mxu0 0
    %1896 = vmatpush.bf16.msra.mxu0 %v1694
    %1897 = vmatmul.bf16.gmra.mxu0 %v1698
    %v1898 = vpop.f32.mrf.mxu0
    %v1899 = vadd.f32 0.0, %v1898
    %v1900 = vpop.f32.mrf.mxu0
    %v1901 = vadd.f32 0.0, %v1900
    %1902 = vmatmul.bf16.gmra.mxu0 %v1701
    %v1903 = vpop.f32.mrf.mxu0
    %v1904 = vadd.f32 0.0, %v1903
    %v1905 = vpop.f32.mrf.mxu0
    %v1906 = vadd.f32 0.0, %v1905
    %1907 = vmatmul.bf16.gmra.mxu0 %v1704
    %v1908 = vpop.f32.mrf.mxu0
    %v1909 = vadd.f32 0.0, %v1908
    %v1910 = vpop.f32.mrf.mxu0
    %v1911 = vadd.f32 0.0, %v1910
    %1912 = vmatmul.bf16.gmra.mxu0 %v1707
    %v1913 = vpop.f32.mrf.mxu0
    %v1914 = vadd.f32 0.0, %v1913
    %v1915 = vpop.f32.mrf.mxu0
    %v1916 = vadd.f32 0.0, %v1915
    %1917 = vmatmul.bf16.gmra.mxu0 %v1710
    %v1918 = vpop.f32.mrf.mxu0
    %v1919 = vadd.f32 0.0, %v1918
    %v1920 = vpop.f32.mrf.mxu0
    %v1921 = vadd.f32 0.0, %v1920
    %1922 = vmatmul.bf16.gmra.mxu0 %v1713
    %v1923 = vpop.f32.mrf.mxu0
    %v1924 = vadd.f32 0.0, %v1923
    %v1925 = vpop.f32.mrf.mxu0
    %v1926 = vadd.f32 0.0, %v1925
    %1927 = vmatmul.bf16.gmra.mxu0 %v1716
    %v1928 = vpop.f32.mrf.mxu0
    %v1929 = vadd.f32 0.0, %v1928
    %v1930 = vpop.f32.mrf.mxu0
    %v1931 = vadd.f32 0.0, %v1930
    %1932 = vmatmul.bf16.gmra.mxu0 %v1719
    %v1933 = vpop.f32.mrf.mxu0
    %v1934 = vadd.f32 0.0, %v1933
    %v1935 = vpop.f32.mrf.mxu0
    %v1936 = vadd.f32 0.0, %v1935
    %1937 = vmatmul.bf16.gmra.mxu0 %v1722
    %v1938 = vpop.f32.mrf.mxu0
    %v1939 = vadd.f32 0.0, %v1938
    %v1940 = vpop.f32.mrf.mxu0
    %v1941 = vadd.f32 0.0, %v1940
    %1942 = vmatmul.bf16.gmra.mxu0 %v1725
    %v1943 = vpop.f32.mrf.mxu0
    %v1944 = vadd.f32 0.0, %v1943
    %v1945 = vpop.f32.mrf.mxu0
    %v1946 = vadd.f32 0.0, %v1945
    %1947 = vmatmul.bf16.gmra.mxu0 %v1728
    %v1948 = vpop.f32.mrf.mxu0
    %v1949 = vadd.f32 0.0, %v1948
    %v1950 = vpop.f32.mrf.mxu0
    %v1951 = vadd.f32 0.0, %v1950
    %1952 = vmatmul.bf16.gmra.mxu0 %v1731
    %v1953 = vpop.f32.mrf.mxu0
    %v1954 = vadd.f32 0.0, %v1953
    %v1955 = vpop.f32.mrf.mxu0
    %v1956 = vadd.f32 0.0, %v1955
    %1957 = vmatmul.bf16.gmra.mxu0 %v1734
    %v1958 = vpop.f32.mrf.mxu0
    %v1959 = vadd.f32 0.0, %v1958
    %v1960 = vpop.f32.mrf.mxu0
    %v1961 = vadd.f32 0.0, %v1960
    %1962 = vmatmul.bf16.gmra.mxu0 %v1737
    %v1963 = vpop.f32.mrf.mxu0
    %v1964 = vadd.f32 0.0, %v1963
    %v1965 = vpop.f32.mrf.mxu0
    %v1966 = vadd.f32 0.0, %v1965
    %1967 = vmatmul.bf16.gmra.mxu0 %v1740
    %v1968 = vpop.f32.mrf.mxu0
    %v1969 = vadd.f32 0.0, %v1968
    %v1970 = vpop.f32.mrf.mxu0
    %v1971 = vadd.f32 0.0, %v1970
    %1972 = vmatmul.bf16.gmra.mxu0 %v1743
    %v1973 = vpop.f32.mrf.mxu0
    %v1974 = vadd.f32 0.0, %v1973
    %v1975 = vpop.f32.mrf.mxu0
    %v1976 = vadd.f32 0.0, %v1975
    %1977 = vmatmul.bf16.gmra.mxu0 %v1746
    %v1978 = vpop.f32.mrf.mxu0
    %v1979 = vadd.f32 0.0, %v1978
    %v1980 = vpop.f32.mrf.mxu0
    %v1981 = vadd.f32 0.0, %v1980
    %1982 = vmatmul.bf16.gmra.mxu0 %v1749
    %v1983 = vpop.f32.mrf.mxu0
    %v1984 = vadd.f32 0.0, %v1983
    %v1985 = vpop.f32.mrf.mxu0
    %v1986 = vadd.f32 0.0, %v1985
    %1987 = vmatmul.bf16.gmra.mxu0 %v1752
    %v1988 = vpop.f32.mrf.mxu0
    %v1989 = vadd.f32 0.0, %v1988
    %v1990 = vpop.f32.mrf.mxu0
    %v1991 = vadd.f32 0.0, %v1990
    %1992 = vmatmul.bf16.gmra.mxu0 %v1755
    %v1993 = vpop.f32.mrf.mxu0
    %v1994 = vadd.f32 0.0, %v1993
    %v1995 = vpop.f32.mrf.mxu0
    %v1996 = vadd.f32 0.0, %v1995
    %1997 = vmatmul.bf16.gmra.mxu0 %v1758
    %v1998 = vpop.f32.mrf.mxu0
    %v1999 = vadd.f32 0.0, %v1998
    %v2000 = vpop.f32.mrf.mxu0
    %v2001 = vadd.f32 0.0, %v2000
    %2002 = vmatmul.bf16.gmra.mxu0 %v1761
    %v2003 = vpop.f32.mrf.mxu0
    %v2004 = vadd.f32 0.0, %v2003
    %v2005 = vpop.f32.mrf.mxu0
    %v2006 = vadd.f32 0.0, %v2005
    %2007 = vmatmul.bf16.gmra.mxu0 %v1764
    %v2008 = vpop.f32.mrf.mxu0
    %v2009 = vadd.f32 0.0, %v2008
    %v2010 = vpop.f32.mrf.mxu0
    %v2011 = vadd.f32 0.0, %v2010
    %2012 = vmatmul.bf16.gmra.mxu0 %v1767
    %v2013 = vpop.f32.mrf.mxu0
    %v2014 = vadd.f32 0.0, %v2013
    %v2015 = vpop.f32.mrf.mxu0
    %v2016 = vadd.f32 0.0, %v2015
    %2017 = vmatmul.bf16.gmra.mxu0 %v1770
    %v2018 = vpop.f32.mrf.mxu0
    %v2019 = vadd.f32 0.0, %v2018
    %v2020 = vpop.f32.mrf.mxu0
    %v2021 = vadd.f32 0.0, %v2020
    %2022 = vmatmul.bf16.gmra.mxu0 %v1773
    %v2023 = vpop.f32.mrf.mxu0
    %v2024 = vadd.f32 0.0, %v2023
    %v2025 = vpop.f32.mrf.mxu0
    %v2026 = vadd.f32 0.0, %v2025
    %2027 = vmatmul.bf16.gmra.mxu0 %v1776
    %v2028 = vpop.f32.mrf.mxu0
    %v2029 = vadd.f32 0.0, %v2028
    %v2030 = vpop.f32.mrf.mxu0
    %v2031 = vadd.f32 0.0, %v2030
    %2032 = vmatmul.bf16.gmra.mxu0 %v1779
    %v2033 = vpop.f32.mrf.mxu0
    %v2034 = vadd.f32 0.0, %v2033
    %v2035 = vpop.f32.mrf.mxu0
    %v2036 = vadd.f32 0.0, %v2035
    %2037 = vmatmul.bf16.gmra.mxu0 %v1782
    %v2038 = vpop.f32.mrf.mxu0
    %v2039 = vadd.f32 0.0, %v2038
    %v2040 = vpop.f32.mrf.mxu0
    %v2041 = vadd.f32 0.0, %v2040
    %2042 = vmatmul.bf16.gmra.mxu0 %v1785
    %v2043 = vpop.f32.mrf.mxu0
    %v2044 = vadd.f32 0.0, %v2043
    %v2045 = vpop.f32.mrf.mxu0
    %v2046 = vadd.f32 0.0, %v2045
    %2047 = vmatmul.bf16.gmra.mxu0 %v1788
    %v2048 = vpop.f32.mrf.mxu0
    %v2049 = vadd.f32 0.0, %v2048
    %v2050 = vpop.f32.mrf.mxu0
    %v2051 = vadd.f32 0.0, %v2050
    %2052 = vmatmul.bf16.gmra.mxu0 %v1791
    %v2053 = vpop.f32.mrf.mxu0
    %v2054 = vadd.f32 0.0, %v2053
    %v2055 = vpop.f32.mrf.mxu0
    %v2056 = vadd.f32 0.0, %v2055
    %2057 = vmatmul.bf16.gmra.mxu0 %v1794
    %v2058 = vpop.f32.mrf.mxu0
    %v2059 = vadd.f32 0.0, %v2058
    %v2060 = vpop.f32.mrf.mxu0
    %v2061 = vadd.f32 0.0, %v2060
    %2062 = vmatmul.bf16.gmra.mxu0 %v1797
    %v2063 = vpop.f32.mrf.mxu0
    %v2064 = vadd.f32 0.0, %v2063
    %v2065 = vpop.f32.mrf.mxu0
    %v2066 = vadd.f32 0.0, %v2065
    %2067 = vmatmul.bf16.gmra.mxu0 %v1800
    %v2068 = vpop.f32.mrf.mxu0
    %v2069 = vadd.f32 0.0, %v2068
    %v2070 = vpop.f32.mrf.mxu0
    %v2071 = vadd.f32 0.0, %v2070
    %2072 = vmatmul.bf16.gmra.mxu0 %v1803
    %v2073 = vpop.f32.mrf.mxu0
    %v2074 = vadd.f32 0.0, %v2073
    %v2075 = vpop.f32.mrf.mxu0
    %v2076 = vadd.f32 0.0, %v2075
    %2077 = vmatmul.bf16.gmra.mxu0 %v1806
    %v2078 = vpop.f32.mrf.mxu0
    %v2079 = vadd.f32 0.0, %v2078
    %v2080 = vpop.f32.mrf.mxu0
    %v2081 = vadd.f32 0.0, %v2080
    %2082 = vmatmul.bf16.gmra.mxu0 %v1809
    %v2083 = vpop.f32.mrf.mxu0
    %v2084 = vadd.f32 0.0, %v2083
    %v2085 = vpop.f32.mrf.mxu0
    %v2086 = vadd.f32 0.0, %v2085
    %2087 = vmatmul.bf16.gmra.mxu0 %v1812
    %v2088 = vpop.f32.mrf.mxu0
    %v2089 = vadd.f32 0.0, %v2088
    %v2090 = vpop.f32.mrf.mxu0
    %v2091 = vadd.f32 0.0, %v2090
    %2092 = vmatmul.bf16.gmra.mxu0 %v1815
    %v2093 = vpop.f32.mrf.mxu0
    %v2094 = vadd.f32 0.0, %v2093
    %v2095 = vpop.f32.mrf.mxu0
    %v2096 = vadd.f32 0.0, %v2095
    %2097 = vmatmul.bf16.gmra.mxu0 %v1818
    %v2098 = vpop.f32.mrf.mxu0
    %v2099 = vadd.f32 0.0, %v2098
    %v2100 = vpop.f32.mrf.mxu0
    %v2101 = vadd.f32 0.0, %v2100
    %2102 = vmatmul.bf16.gmra.mxu0 %v1821
    %v2103 = vpop.f32.mrf.mxu0
    %v2104 = vadd.f32 0.0, %v2103
    %v2105 = vpop.f32.mrf.mxu0
    %v2106 = vadd.f32 0.0, %v2105
    %2107 = vmatmul.bf16.gmra.mxu0 %v1824
    %v2108 = vpop.f32.mrf.mxu0
    %v2109 = vadd.f32 0.0, %v2108
    %v2110 = vpop.f32.mrf.mxu0
    %v2111 = vadd.f32 0.0, %v2110
    %2112 = vmatmul.bf16.gmra.mxu0 %v1827
    %v2113 = vpop.f32.mrf.mxu0
    %v2114 = vadd.f32 0.0, %v2113
    %v2115 = vpop.f32.mrf.mxu0
    %v2116 = vadd.f32 0.0, %v2115
    %2117 = vmatmul.bf16.gmra.mxu0 %v1830
    %v2118 = vpop.f32.mrf.mxu0
    %v2119 = vadd.f32 0.0, %v2118
    %v2120 = vpop.f32.mrf.mxu0
    %v2121 = vadd.f32 0.0, %v2120
    %2122 = vmatmul.bf16.gmra.mxu0 %v1833
    %v2123 = vpop.f32.mrf.mxu0
    %v2124 = vadd.f32 0.0, %v2123
    %v2125 = vpop.f32.mrf.mxu0
    %v2126 = vadd.f32 0.0, %v2125
    %2127 = vmatmul.bf16.gmra.mxu0 %v1836
    %v2128 = vpop.f32.mrf.mxu0
    %v2129 = vadd.f32 0.0, %v2128
    %v2130 = vpop.f32.mrf.mxu0
    %v2131 = vadd.f32 0.0, %v2130
    %2132 = vmatmul.bf16.gmra.mxu0 %v1839
    %v2133 = vpop.f32.mrf.mxu0
    %v2134 = vadd.f32 0.0, %v2133
    %v2135 = vpop.f32.mrf.mxu0
    %v2136 = vadd.f32 0.0, %v2135
    %2137 = vmatmul.bf16.gmra.mxu0 %v1842
    %v2138 = vpop.f32.mrf.mxu0
    %v2139 = vadd.f32 0.0, %v2138
    %v2140 = vpop.f32.mrf.mxu0
    %v2141 = vadd.f32 0.0, %v2140
    %2142 = vmatmul.bf16.gmra.mxu0 %v1845
    %v2143 = vpop.f32.mrf.mxu0
    %v2144 = vadd.f32 0.0, %v2143
    %v2145 = vpop.f32.mrf.mxu0
    %v2146 = vadd.f32 0.0, %v2145
    %2147 = vmatmul.bf16.gmra.mxu0 %v1848
    %v2148 = vpop.f32.mrf.mxu0
    %v2149 = vadd.f32 0.0, %v2148
    %v2150 = vpop.f32.mrf.mxu0
    %v2151 = vadd.f32 0.0, %v2150
    %2152 = vmatmul.bf16.gmra.mxu0 %v1851
    %v2153 = vpop.f32.mrf.mxu0
    %v2154 = vadd.f32 0.0, %v2153
    %v2155 = vpop.f32.mrf.mxu0
    %v2156 = vadd.f32 0.0, %v2155
    %2157 = vmatmul.bf16.gmra.mxu0 %v1854
    %v2158 = vpop.f32.mrf.mxu0
    %v2159 = vadd.f32 0.0, %v2158
    %v2160 = vpop.f32.mrf.mxu0
    %v2161 = vadd.f32 0.0, %v2160
    %2162 = vmatmul.bf16.gmra.mxu0 %v1857
    %v2163 = vpop.f32.mrf.mxu0
    %v2164 = vadd.f32 0.0, %v2163
    %v2165 = vpop.f32.mrf.mxu0
    %v2166 = vadd.f32 0.0, %v2165
    %2167 = vmatmul.bf16.gmra.mxu0 %v1860
    %v2168 = vpop.f32.mrf.mxu0
    %v2169 = vadd.f32 0.0, %v2168
    %v2170 = vpop.f32.mrf.mxu0
    %v2171 = vadd.f32 0.0, %v2170
    %2172 = vmatmul.bf16.gmra.mxu0 %v1863
    %v2173 = vpop.f32.mrf.mxu0
    %v2174 = vadd.f32 0.0, %v2173
    %v2175 = vpop.f32.mrf.mxu0
    %v2176 = vadd.f32 0.0, %v2175
    %2177 = vmatmul.bf16.gmra.mxu0 %v1866
    %v2178 = vpop.f32.mrf.mxu0
    %v2179 = vadd.f32 0.0, %v2178
    %v2180 = vpop.f32.mrf.mxu0
    %v2181 = vadd.f32 0.0, %v2180
    %2182 = vmatmul.bf16.gmra.mxu0 %v1869
    %v2183 = vpop.f32.mrf.mxu0
    %v2184 = vadd.f32 0.0, %v2183
    %v2185 = vpop.f32.mrf.mxu0
    %v2186 = vadd.f32 0.0, %v2185
    %2187 = vmatmul.bf16.gmra.mxu0 %v1872
    %v2188 = vpop.f32.mrf.mxu0
    %v2189 = vadd.f32 0.0, %v2188
    %v2190 = vpop.f32.mrf.mxu0
    %v2191 = vadd.f32 0.0, %v2190
    %2192 = vmatmul.bf16.gmra.mxu0 %v1875
    %v2193 = vpop.f32.mrf.mxu0
    %v2194 = vadd.f32 0.0, %v2193
    %v2195 = vpop.f32.mrf.mxu0
    %v2196 = vadd.f32 0.0, %v2195
    %2197 = vmatmul.bf16.gmra.mxu0 %v1878
    %v2198 = vpop.f32.mrf.mxu0
    %v2199 = vadd.f32 0.0, %v2198
    %v2200 = vpop.f32.mrf.mxu0
    %v2201 = vadd.f32 0.0, %v2200
    %2202 = vmatmul.bf16.gmra.mxu0 %v1881
    %v2203 = vpop.f32.mrf.mxu0
    %v2204 = vadd.f32 0.0, %v2203
    %v2205 = vpop.f32.mrf.mxu0
    %v2206 = vadd.f32 0.0, %v2205
    %2207 = vmatmul.bf16.gmra.mxu0 %v1884
    %v2208 = vpop.f32.mrf.mxu0
    %v2209 = vadd.f32 0.0, %v2208
    %v2210 = vpop.f32.mrf.mxu0
    %v2211 = vadd.f32 0.0, %v2210
    %2212 = vmatmul.bf16.gmra.mxu0 %v1887
    %v2213 = vpop.f32.mrf.mxu0
    %v2214 = vadd.f32 0.0, %v2213
    %v2215 = vpop.f32.mrf.mxu0
    %v2216 = vadd.f32 0.0, %v2215
    %2217 = vdwg.mxu0
    %v2218 = vlaneseq
    %v2219 = vshrl.u32 %v2218, 7
    %v2220 = vadd.s32 %v2219, 8
    %v2221 = vadd.s32 %v2219, 16
    %v2222 = vadd.s32 %v2219, 24
    %v2223 = vadd.s32 %v2219, 32
    %v2224 = vadd.s32 %v2219, 40
    %v2225 = vadd.s32 %v2219, 48
    %v2226 = vadd.s32 %v2219, 56
    %v2227 = vadd.s32 %v2219, 64
    %v2228 = vadd.s32 %v2219, 72
    %v2229 = vadd.s32 %v2219, 80
    %v2230 = vadd.s32 %v2219, 88
    %v2231 = vadd.s32 %v2219, 96
    %v2232 = vadd.s32 %v2219, 104
    %v2233 = vadd.s32 %v2219, 112
    %v2234 = vadd.s32 %v2219, 120
    %v2235 = vlaneseq
    %v2236 = vand.u32 %v2235, 127
    %vm2237 = vcmp.eq.s32.totalorder %v2219, %v2236
    %vm2238 = vcmp.eq.s32.totalorder %v2220, %v2236
    %vm2239 = vcmp.eq.s32.totalorder %v2221, %v2236
    %vm2240 = vcmp.eq.s32.totalorder %v2222, %v2236
    %vm2241 = vcmp.eq.s32.totalorder %v2223, %v2236
    %vm2242 = vcmp.eq.s32.totalorder %v2224, %v2236
    %vm2243 = vcmp.eq.s32.totalorder %v2225, %v2236
    %vm2244 = vcmp.eq.s32.totalorder %v2226, %v2236
    %vm2245 = vcmp.eq.s32.totalorder %v2227, %v2236
    %vm2246 = vcmp.eq.s32.totalorder %v2228, %v2236
    %vm2247 = vcmp.eq.s32.totalorder %v2229, %v2236
    %vm2248 = vcmp.eq.s32.totalorder %v2230, %v2236
    %vm2249 = vcmp.eq.s32.totalorder %v2231, %v2236
    %vm2250 = vcmp.eq.s32.totalorder %v2232, %v2236
    %vm2251 = vcmp.eq.s32.totalorder %v2233, %v2236
    %vm2252 = vcmp.eq.s32.totalorder %v2234, %v2236
    %v2253 = vsel %vm2237, 1, 0
    %v2254 = vsel %vm2238, 1, 0
    %v2255 = vsel %vm2239, 1, 0
    %v2256 = vsel %vm2240, 1, 0
    %v2257 = vsel %vm2241, 1, 0
    %v2258 = vsel %vm2242, 1, 0
    %v2259 = vsel %vm2243, 1, 0
    %v2260 = vsel %vm2244, 1, 0
    %v2261 = vsel %vm2245, 1, 0
    %v2262 = vsel %vm2246, 1, 0
    %v2263 = vsel %vm2247, 1, 0
    %v2264 = vsel %vm2248, 1, 0
    %v2265 = vsel %vm2249, 1, 0
    %v2266 = vsel %vm2250, 1, 0
    %v2267 = vsel %vm2251, 1, 0
    %v2268 = vsel %vm2252, 1, 0
    %vm2269 = vcmp.eq.s32.totalorder %v2253, 1
    %vm2270 = vcmp.eq.s32.totalorder %v2254, 1
    %vm2271 = vcmp.eq.s32.totalorder %v2255, 1
    %vm2272 = vcmp.eq.s32.totalorder %v2256, 1
    %vm2273 = vcmp.eq.s32.totalorder %v2257, 1
    %vm2274 = vcmp.eq.s32.totalorder %v2258, 1
    %vm2275 = vcmp.eq.s32.totalorder %v2259, 1
    %vm2276 = vcmp.eq.s32.totalorder %v2260, 1
    %vm2277 = vcmp.eq.s32.totalorder %v2261, 1
    %vm2278 = vcmp.eq.s32.totalorder %v2262, 1
    %vm2279 = vcmp.eq.s32.totalorder %v2263, 1
    %vm2280 = vcmp.eq.s32.totalorder %v2264, 1
    %vm2281 = vcmp.eq.s32.totalorder %v2265, 1
    %vm2282 = vcmp.eq.s32.totalorder %v2266, 1
    %vm2283 = vcmp.eq.s32.totalorder %v2267, 1
    %vm2284 = vcmp.eq.s32.totalorder %v2268, 1
    %2286 = vset.pattern.permute.xlu0 0
    %2287 = vperm.xlu0 %2286, %v1899
    %v2288 = vpop.permute.xlu0 %2287
    %2291 = vset.pattern.permute.xlu0 0
    %2292 = vperm.xlu0 %2291, %v1901
    %v2293 = vpop.permute.xlu0 %2292
    %2296 = vset.pattern.permute.xlu0 0
    %2297 = vperm.xlu0 %2296, %v1904
    %v2298 = vpop.permute.xlu0 %2297
    %2301 = vset.pattern.permute.xlu0 0
    %2302 = vperm.xlu0 %2301, %v1906
    %v2303 = vpop.permute.xlu0 %2302
    %2306 = vset.pattern.permute.xlu0 0
    %2307 = vperm.xlu0 %2306, %v1909
    %v2308 = vpop.permute.xlu0 %2307
    %2311 = vset.pattern.permute.xlu0 0
    %2312 = vperm.xlu0 %2311, %v1911
    %v2313 = vpop.permute.xlu0 %2312
    %2316 = vset.pattern.permute.xlu0 0
    %2317 = vperm.xlu0 %2316, %v1914
    %v2318 = vpop.permute.xlu0 %2317
    %2321 = vset.pattern.permute.xlu0 0
    %2322 = vperm.xlu0 %2321, %v1916
    %v2323 = vpop.permute.xlu0 %2322
    %2326 = vset.pattern.permute.xlu0 0
    %2327 = vperm.xlu0 %2326, %v1919
    %v2328 = vpop.permute.xlu0 %2327
    %2331 = vset.pattern.permute.xlu0 0
    %2332 = vperm.xlu0 %2331, %v1921
    %v2333 = vpop.permute.xlu0 %2332
    %2336 = vset.pattern.permute.xlu0 0
    %2337 = vperm.xlu0 %2336, %v1924
    %v2338 = vpop.permute.xlu0 %2337
    %2341 = vset.pattern.permute.xlu0 0
    %2342 = vperm.xlu0 %2341, %v1926
    %v2343 = vpop.permute.xlu0 %2342
    %2346 = vset.pattern.permute.xlu0 0
    %2347 = vperm.xlu0 %2346, %v1929
    %v2348 = vpop.permute.xlu0 %2347
    %2351 = vset.pattern.permute.xlu0 0
    %2352 = vperm.xlu0 %2351, %v1931
    %v2353 = vpop.permute.xlu0 %2352
    %2356 = vset.pattern.permute.xlu0 0
    %2357 = vperm.xlu0 %2356, %v1934
    %v2358 = vpop.permute.xlu0 %2357
    %2361 = vset.pattern.permute.xlu0 0
    %2362 = vperm.xlu0 %2361, %v1936
    %v2363 = vpop.permute.xlu0 %2362
    %2366 = vset.pattern.permute.xlu0 0
    %2367 = vperm.xlu0 %2366, %v1939
    %v2368 = vpop.permute.xlu0 %2367
    %2371 = vset.pattern.permute.xlu0 0
    %2372 = vperm.xlu0 %2371, %v1941
    %v2373 = vpop.permute.xlu0 %2372
    %2376 = vset.pattern.permute.xlu0 0
    %2377 = vperm.xlu0 %2376, %v1944
    %v2378 = vpop.permute.xlu0 %2377
    %2381 = vset.pattern.permute.xlu0 0
    %2382 = vperm.xlu0 %2381, %v1946
    %v2383 = vpop.permute.xlu0 %2382
    %2386 = vset.pattern.permute.xlu0 0
    %2387 = vperm.xlu0 %2386, %v1949
    %v2388 = vpop.permute.xlu0 %2387
    %2391 = vset.pattern.permute.xlu0 0
    %2392 = vperm.xlu0 %2391, %v1951
    %v2393 = vpop.permute.xlu0 %2392
    %2396 = vset.pattern.permute.xlu0 0
    %2397 = vperm.xlu0 %2396, %v1954
    %v2398 = vpop.permute.xlu0 %2397
    %2401 = vset.pattern.permute.xlu0 0
    %2402 = vperm.xlu0 %2401, %v1956
    %v2403 = vpop.permute.xlu0 %2402
    %2406 = vset.pattern.permute.xlu0 0
    %2407 = vperm.xlu0 %2406, %v1959
    %v2408 = vpop.permute.xlu0 %2407
    %2411 = vset.pattern.permute.xlu0 0
    %2412 = vperm.xlu0 %2411, %v1961
    %v2413 = vpop.permute.xlu0 %2412
    %2416 = vset.pattern.permute.xlu0 0
    %2417 = vperm.xlu0 %2416, %v1964
    %v2418 = vpop.permute.xlu0 %2417
    %2421 = vset.pattern.permute.xlu0 0
    %2422 = vperm.xlu0 %2421, %v1966
    %v2423 = vpop.permute.xlu0 %2422
    %2426 = vset.pattern.permute.xlu0 0
    %2427 = vperm.xlu0 %2426, %v1969
    %v2428 = vpop.permute.xlu0 %2427
    %2431 = vset.pattern.permute.xlu0 0
    %2432 = vperm.xlu0 %2431, %v1971
    %v2433 = vpop.permute.xlu0 %2432
    %2436 = vset.pattern.permute.xlu0 0
    %2437 = vperm.xlu0 %2436, %v1974
    %v2438 = vpop.permute.xlu0 %2437
    %2441 = vset.pattern.permute.xlu0 0
    %2442 = vperm.xlu0 %2441, %v1976
    %v2443 = vpop.permute.xlu0 %2442
    %2446 = vset.pattern.permute.xlu0 0
    %2447 = vperm.xlu0 %2446, %v1979
    %v2448 = vpop.permute.xlu0 %2447
    %2451 = vset.pattern.permute.xlu0 0
    %2452 = vperm.xlu0 %2451, %v1981
    %v2453 = vpop.permute.xlu0 %2452
    %2456 = vset.pattern.permute.xlu0 0
    %2457 = vperm.xlu0 %2456, %v1984
    %v2458 = vpop.permute.xlu0 %2457
    %2461 = vset.pattern.permute.xlu0 0
    %2462 = vperm.xlu0 %2461, %v1986
    %v2463 = vpop.permute.xlu0 %2462
    %2466 = vset.pattern.permute.xlu0 0
    %2467 = vperm.xlu0 %2466, %v1989
    %v2468 = vpop.permute.xlu0 %2467
    %2471 = vset.pattern.permute.xlu0 0
    %2472 = vperm.xlu0 %2471, %v1991
    %v2473 = vpop.permute.xlu0 %2472
    %2476 = vset.pattern.permute.xlu0 0
    %2477 = vperm.xlu0 %2476, %v1994
    %v2478 = vpop.permute.xlu0 %2477
    %2481 = vset.pattern.permute.xlu0 0
    %2482 = vperm.xlu0 %2481, %v1996
    %v2483 = vpop.permute.xlu0 %2482
    %2486 = vset.pattern.permute.xlu0 0
    %2487 = vperm.xlu0 %2486, %v1999
    %v2488 = vpop.permute.xlu0 %2487
    %2491 = vset.pattern.permute.xlu0 0
    %2492 = vperm.xlu0 %2491, %v2001
    %v2493 = vpop.permute.xlu0 %2492
    %2496 = vset.pattern.permute.xlu0 0
    %2497 = vperm.xlu0 %2496, %v2004
    %v2498 = vpop.permute.xlu0 %2497
    %2501 = vset.pattern.permute.xlu0 0
    %2502 = vperm.xlu0 %2501, %v2006
    %v2503 = vpop.permute.xlu0 %2502
    %2506 = vset.pattern.permute.xlu0 0
    %2507 = vperm.xlu0 %2506, %v2009
    %v2508 = vpop.permute.xlu0 %2507
    %2511 = vset.pattern.permute.xlu0 0
    %2512 = vperm.xlu0 %2511, %v2011
    %v2513 = vpop.permute.xlu0 %2512
    %2516 = vset.pattern.permute.xlu0 0
    %2517 = vperm.xlu0 %2516, %v2014
    %v2518 = vpop.permute.xlu0 %2517
    %2521 = vset.pattern.permute.xlu0 0
    %2522 = vperm.xlu0 %2521, %v2016
    %v2523 = vpop.permute.xlu0 %2522
    %2526 = vset.pattern.permute.xlu0 0
    %2527 = vperm.xlu0 %2526, %v2019
    %v2528 = vpop.permute.xlu0 %2527
    %2531 = vset.pattern.permute.xlu0 0
    %2532 = vperm.xlu0 %2531, %v2021
    %v2533 = vpop.permute.xlu0 %2532
    %2536 = vset.pattern.permute.xlu0 0
    %2537 = vperm.xlu0 %2536, %v2024
    %v2538 = vpop.permute.xlu0 %2537
    %2541 = vset.pattern.permute.xlu0 0
    %2542 = vperm.xlu0 %2541, %v2026
    %v2543 = vpop.permute.xlu0 %2542
    %2546 = vset.pattern.permute.xlu0 0
    %2547 = vperm.xlu0 %2546, %v2029
    %v2548 = vpop.permute.xlu0 %2547
    %2551 = vset.pattern.permute.xlu0 0
    %2552 = vperm.xlu0 %2551, %v2031
    %v2553 = vpop.permute.xlu0 %2552
    %2556 = vset.pattern.permute.xlu0 0
    %2557 = vperm.xlu0 %2556, %v2034
    %v2558 = vpop.permute.xlu0 %2557
    %2561 = vset.pattern.permute.xlu0 0
    %2562 = vperm.xlu0 %2561, %v2036
    %v2563 = vpop.permute.xlu0 %2562
    %2566 = vset.pattern.permute.xlu0 0
    %2567 = vperm.xlu0 %2566, %v2039
    %v2568 = vpop.permute.xlu0 %2567
    %2571 = vset.pattern.permute.xlu0 0
    %2572 = vperm.xlu0 %2571, %v2041
    %v2573 = vpop.permute.xlu0 %2572
    %2576 = vset.pattern.permute.xlu0 0
    %2577 = vperm.xlu0 %2576, %v2044
    %v2578 = vpop.permute.xlu0 %2577
    %2581 = vset.pattern.permute.xlu0 0
    %2582 = vperm.xlu0 %2581, %v2046
    %v2583 = vpop.permute.xlu0 %2582
    %2586 = vset.pattern.permute.xlu0 0
    %2587 = vperm.xlu0 %2586, %v2049
    %v2588 = vpop.permute.xlu0 %2587
    %2591 = vset.pattern.permute.xlu0 0
    %2592 = vperm.xlu0 %2591, %v2051
    %v2593 = vpop.permute.xlu0 %2592
    %2596 = vset.pattern.permute.xlu0 0
    %2597 = vperm.xlu0 %2596, %v2054
    %v2598 = vpop.permute.xlu0 %2597
    %2601 = vset.pattern.permute.xlu0 0
    %2602 = vperm.xlu0 %2601, %v2056
    %v2603 = vpop.permute.xlu0 %2602
    %2606 = vset.pattern.permute.xlu0 0
    %2607 = vperm.xlu0 %2606, %v2059
    %v2608 = vpop.permute.xlu0 %2607
    %2611 = vset.pattern.permute.xlu0 0
    %2612 = vperm.xlu0 %2611, %v2061
    %v2613 = vpop.permute.xlu0 %2612
    %2616 = vset.pattern.permute.xlu0 0
    %2617 = vperm.xlu0 %2616, %v2064
    %v2618 = vpop.permute.xlu0 %2617
    %2621 = vset.pattern.permute.xlu0 0
    %2622 = vperm.xlu0 %2621, %v2066
    %v2623 = vpop.permute.xlu0 %2622
    %2626 = vset.pattern.permute.xlu0 0
    %2627 = vperm.xlu0 %2626, %v2069
    %v2628 = vpop.permute.xlu0 %2627
    %2631 = vset.pattern.permute.xlu0 0
    %2632 = vperm.xlu0 %2631, %v2071
    %v2633 = vpop.permute.xlu0 %2632
    %2636 = vset.pattern.permute.xlu0 0
    %2637 = vperm.xlu0 %2636, %v2074
    %v2638 = vpop.permute.xlu0 %2637
    %2641 = vset.pattern.permute.xlu0 0
    %2642 = vperm.xlu0 %2641, %v2076
    %v2643 = vpop.permute.xlu0 %2642
    %2646 = vset.pattern.permute.xlu0 0
    %2647 = vperm.xlu0 %2646, %v2079
    %v2648 = vpop.permute.xlu0 %2647
    %2651 = vset.pattern.permute.xlu0 0
    %2652 = vperm.xlu0 %2651, %v2081
    %v2653 = vpop.permute.xlu0 %2652
    %2656 = vset.pattern.permute.xlu0 0
    %2657 = vperm.xlu0 %2656, %v2084
    %v2658 = vpop.permute.xlu0 %2657
    %2661 = vset.pattern.permute.xlu0 0
    %2662 = vperm.xlu0 %2661, %v2086
    %v2663 = vpop.permute.xlu0 %2662
    %2666 = vset.pattern.permute.xlu0 0
    %2667 = vperm.xlu0 %2666, %v2089
    %v2668 = vpop.permute.xlu0 %2667
    %2671 = vset.pattern.permute.xlu0 0
    %2672 = vperm.xlu0 %2671, %v2091
    %v2673 = vpop.permute.xlu0 %2672
    %2676 = vset.pattern.permute.xlu0 0
    %2677 = vperm.xlu0 %2676, %v2094
    %v2678 = vpop.permute.xlu0 %2677
    %2681 = vset.pattern.permute.xlu0 0
    %2682 = vperm.xlu0 %2681, %v2096
    %v2683 = vpop.permute.xlu0 %2682
    %2686 = vset.pattern.permute.xlu0 0
    %2687 = vperm.xlu0 %2686, %v2099
    %v2688 = vpop.permute.xlu0 %2687
    %2691 = vset.pattern.permute.xlu0 0
    %2692 = vperm.xlu0 %2691, %v2101
    %v2693 = vpop.permute.xlu0 %2692
    %2696 = vset.pattern.permute.xlu0 0
    %2697 = vperm.xlu0 %2696, %v2104
    %v2698 = vpop.permute.xlu0 %2697
    %2701 = vset.pattern.permute.xlu0 0
    %2702 = vperm.xlu0 %2701, %v2106
    %v2703 = vpop.permute.xlu0 %2702
    %2706 = vset.pattern.permute.xlu0 0
    %2707 = vperm.xlu0 %2706, %v2109
    %v2708 = vpop.permute.xlu0 %2707
    %2711 = vset.pattern.permute.xlu0 0
    %2712 = vperm.xlu0 %2711, %v2111
    %v2713 = vpop.permute.xlu0 %2712
    %2716 = vset.pattern.permute.xlu0 0
    %2717 = vperm.xlu0 %2716, %v2114
    %v2718 = vpop.permute.xlu0 %2717
    %2721 = vset.pattern.permute.xlu0 0
    %2722 = vperm.xlu0 %2721, %v2116
    %v2723 = vpop.permute.xlu0 %2722
    %2726 = vset.pattern.permute.xlu0 0
    %2727 = vperm.xlu0 %2726, %v2119
    %v2728 = vpop.permute.xlu0 %2727
    %2731 = vset.pattern.permute.xlu0 0
    %2732 = vperm.xlu0 %2731, %v2121
    %v2733 = vpop.permute.xlu0 %2732
    %2736 = vset.pattern.permute.xlu0 0
    %2737 = vperm.xlu0 %2736, %v2124
    %v2738 = vpop.permute.xlu0 %2737
    %2741 = vset.pattern.permute.xlu0 0
    %2742 = vperm.xlu0 %2741, %v2126
    %v2743 = vpop.permute.xlu0 %2742
    %2746 = vset.pattern.permute.xlu0 0
    %2747 = vperm.xlu0 %2746, %v2129
    %v2748 = vpop.permute.xlu0 %2747
    %2751 = vset.pattern.permute.xlu0 0
    %2752 = vperm.xlu0 %2751, %v2131
    %v2753 = vpop.permute.xlu0 %2752
    %2756 = vset.pattern.permute.xlu0 0
    %2757 = vperm.xlu0 %2756, %v2134
    %v2758 = vpop.permute.xlu0 %2757
    %2761 = vset.pattern.permute.xlu0 0
    %2762 = vperm.xlu0 %2761, %v2136
    %v2763 = vpop.permute.xlu0 %2762
    %2766 = vset.pattern.permute.xlu0 0
    %2767 = vperm.xlu0 %2766, %v2139
    %v2768 = vpop.permute.xlu0 %2767
    %2771 = vset.pattern.permute.xlu0 0
    %2772 = vperm.xlu0 %2771, %v2141
    %v2773 = vpop.permute.xlu0 %2772
    %2776 = vset.pattern.permute.xlu0 0
    %2777 = vperm.xlu0 %2776, %v2144
    %v2778 = vpop.permute.xlu0 %2777
    %2781 = vset.pattern.permute.xlu0 0
    %2782 = vperm.xlu0 %2781, %v2146
    %v2783 = vpop.permute.xlu0 %2782
    %2786 = vset.pattern.permute.xlu0 0
    %2787 = vperm.xlu0 %2786, %v2149
    %v2788 = vpop.permute.xlu0 %2787
    %2791 = vset.pattern.permute.xlu0 0
    %2792 = vperm.xlu0 %2791, %v2151
    %v2793 = vpop.permute.xlu0 %2792
    %2796 = vset.pattern.permute.xlu0 0
    %2797 = vperm.xlu0 %2796, %v2154
    %v2798 = vpop.permute.xlu0 %2797
    %2801 = vset.pattern.permute.xlu0 0
    %2802 = vperm.xlu0 %2801, %v2156
    %v2803 = vpop.permute.xlu0 %2802
    %2806 = vset.pattern.permute.xlu0 0
    %2807 = vperm.xlu0 %2806, %v2159
    %v2808 = vpop.permute.xlu0 %2807
    %2811 = vset.pattern.permute.xlu0 0
    %2812 = vperm.xlu0 %2811, %v2161
    %v2813 = vpop.permute.xlu0 %2812
    %2816 = vset.pattern.permute.xlu0 0
    %2817 = vperm.xlu0 %2816, %v2164
    %v2818 = vpop.permute.xlu0 %2817
    %2821 = vset.pattern.permute.xlu0 0
    %2822 = vperm.xlu0 %2821, %v2166
    %v2823 = vpop.permute.xlu0 %2822
    %2826 = vset.pattern.permute.xlu0 0
    %2827 = vperm.xlu0 %2826, %v2169
    %v2828 = vpop.permute.xlu0 %2827
    %2831 = vset.pattern.permute.xlu0 0
    %2832 = vperm.xlu0 %2831, %v2171
    %v2833 = vpop.permute.xlu0 %2832
    %2836 = vset.pattern.permute.xlu0 0
    %2837 = vperm.xlu0 %2836, %v2174
    %v2838 = vpop.permute.xlu0 %2837
    %2841 = vset.pattern.permute.xlu0 0
    %2842 = vperm.xlu0 %2841, %v2176
    %v2843 = vpop.permute.xlu0 %2842
    %2846 = vset.pattern.permute.xlu0 0
    %2847 = vperm.xlu0 %2846, %v2179
    %v2848 = vpop.permute.xlu0 %2847
    %2851 = vset.pattern.permute.xlu0 0
    %2852 = vperm.xlu0 %2851, %v2181
    %v2853 = vpop.permute.xlu0 %2852
    %2856 = vset.pattern.permute.xlu0 0
    %2857 = vperm.xlu0 %2856, %v2184
    %v2858 = vpop.permute.xlu0 %2857
    %2861 = vset.pattern.permute.xlu0 0
    %2862 = vperm.xlu0 %2861, %v2186
    %v2863 = vpop.permute.xlu0 %2862
    %2866 = vset.pattern.permute.xlu0 0
    %2867 = vperm.xlu0 %2866, %v2189
    %v2868 = vpop.permute.xlu0 %2867
    %2871 = vset.pattern.permute.xlu0 0
    %2872 = vperm.xlu0 %2871, %v2191
    %v2873 = vpop.permute.xlu0 %2872
    %2876 = vset.pattern.permute.xlu0 0
    %2877 = vperm.xlu0 %2876, %v2194
    %v2878 = vpop.permute.xlu0 %2877
    %2881 = vset.pattern.permute.xlu0 0
    %2882 = vperm.xlu0 %2881, %v2196
    %v2883 = vpop.permute.xlu0 %2882
    %2886 = vset.pattern.permute.xlu0 0
    %2887 = vperm.xlu0 %2886, %v2199
    %v2888 = vpop.permute.xlu0 %2887
    %2891 = vset.pattern.permute.xlu0 0
    %2892 = vperm.xlu0 %2891, %v2201
    %v2893 = vpop.permute.xlu0 %2892
    %2896 = vset.pattern.permute.xlu0 0
    %2897 = vperm.xlu0 %2896, %v2204
    %v2898 = vpop.permute.xlu0 %2897
    %2901 = vset.pattern.permute.xlu0 0
    %2902 = vperm.xlu0 %2901, %v2206
    %v2903 = vpop.permute.xlu0 %2902
    %2906 = vset.pattern.permute.xlu0 0
    %2907 = vperm.xlu0 %2906, %v2209
    %v2908 = vpop.permute.xlu0 %2907
    %2911 = vset.pattern.permute.xlu0 0
    %2912 = vperm.xlu0 %2911, %v2211
    %v2913 = vpop.permute.xlu0 %2912
    %2916 = vset.pattern.permute.xlu0 0
    %2917 = vperm.xlu0 %2916, %v2214
    %v2918 = vpop.permute.xlu0 %2917
    %2921 = vset.pattern.permute.xlu0 0
    %2922 = vperm.xlu0 %2921, %v2216
    %v2923 = vpop.permute.xlu0 %2922
    %v2925 = vsel %vm2269, %v2288, 0.0
    %v2926 = vsel %vm2270, %v2293, 0.0
    %v2927 = vsel %vm2271, %v2298, 0.0
    %v2928 = vsel %vm2272, %v2303, 0.0
    %v2929 = vsel %vm2273, %v2308, 0.0
    %v2930 = vsel %vm2274, %v2313, 0.0
    %v2931 = vsel %vm2275, %v2318, 0.0
    %v2932 = vsel %vm2276, %v2323, 0.0
    %v2933 = vsel %vm2277, %v2328, 0.0
    %v2934 = vsel %vm2278, %v2333, 0.0
    %v2935 = vsel %vm2279, %v2338, 0.0
    %v2936 = vsel %vm2280, %v2343, 0.0
    %v2937 = vsel %vm2281, %v2348, 0.0
    %v2938 = vsel %vm2282, %v2353, 0.0
    %v2939 = vsel %vm2283, %v2358, 0.0
    %v2940 = vsel %vm2284, %v2363, 0.0
    %v2941 = vsel %vm2269, %v2368, 0.0
    %v2942 = vsel %vm2270, %v2373, 0.0
    %v2943 = vsel %vm2271, %v2378, 0.0
    %v2944 = vsel %vm2272, %v2383, 0.0
    %v2945 = vsel %vm2273, %v2388, 0.0
    %v2946 = vsel %vm2274, %v2393, 0.0
    %v2947 = vsel %vm2275, %v2398, 0.0
    %v2948 = vsel %vm2276, %v2403, 0.0
    %v2949 = vsel %vm2277, %v2408, 0.0
    %v2950 = vsel %vm2278, %v2413, 0.0
    %v2951 = vsel %vm2279, %v2418, 0.0
    %v2952 = vsel %vm2280, %v2423, 0.0
    %v2953 = vsel %vm2281, %v2428, 0.0
    %v2954 = vsel %vm2282, %v2433, 0.0
    %v2955 = vsel %vm2283, %v2438, 0.0
    %v2956 = vsel %vm2284, %v2443, 0.0
    %v2957 = vsel %vm2269, %v2448, 0.0
    %v2958 = vsel %vm2270, %v2453, 0.0
    %v2959 = vsel %vm2271, %v2458, 0.0
    %v2960 = vsel %vm2272, %v2463, 0.0
    %v2961 = vsel %vm2273, %v2468, 0.0
    %v2962 = vsel %vm2274, %v2473, 0.0
    %v2963 = vsel %vm2275, %v2478, 0.0
    %v2964 = vsel %vm2276, %v2483, 0.0
    %v2965 = vsel %vm2277, %v2488, 0.0
    %v2966 = vsel %vm2278, %v2493, 0.0
    %v2967 = vsel %vm2279, %v2498, 0.0
    %v2968 = vsel %vm2280, %v2503, 0.0
    %v2969 = vsel %vm2281, %v2508, 0.0
    %v2970 = vsel %vm2282, %v2513, 0.0
    %v2971 = vsel %vm2283, %v2518, 0.0
    %v2972 = vsel %vm2284, %v2523, 0.0
    %v2973 = vsel %vm2269, %v2528, 0.0
    %v2974 = vsel %vm2270, %v2533, 0.0
    %v2975 = vsel %vm2271, %v2538, 0.0
    %v2976 = vsel %vm2272, %v2543, 0.0
    %v2977 = vsel %vm2273, %v2548, 0.0
    %v2978 = vsel %vm2274, %v2553, 0.0
    %v2979 = vsel %vm2275, %v2558, 0.0
    %v2980 = vsel %vm2276, %v2563, 0.0
    %v2981 = vsel %vm2277, %v2568, 0.0
    %v2982 = vsel %vm2278, %v2573, 0.0
    %v2983 = vsel %vm2279, %v2578, 0.0
    %v2984 = vsel %vm2280, %v2583, 0.0
    %v2985 = vsel %vm2281, %v2588, 0.0
    %v2986 = vsel %vm2282, %v2593, 0.0
    %v2987 = vsel %vm2283, %v2598, 0.0
    %v2988 = vsel %vm2284, %v2603, 0.0
    %v2989 = vsel %vm2269, %v2608, 0.0
    %v2990 = vsel %vm2270, %v2613, 0.0
    %v2991 = vsel %vm2271, %v2618, 0.0
    %v2992 = vsel %vm2272, %v2623, 0.0
    %v2993 = vsel %vm2273, %v2628, 0.0
    %v2994 = vsel %vm2274, %v2633, 0.0
    %v2995 = vsel %vm2275, %v2638, 0.0
    %v2996 = vsel %vm2276, %v2643, 0.0
    %v2997 = vsel %vm2277, %v2648, 0.0
    %v2998 = vsel %vm2278, %v2653, 0.0
    %v2999 = vsel %vm2279, %v2658, 0.0
    %v3000 = vsel %vm2280, %v2663, 0.0
    %v3001 = vsel %vm2281, %v2668, 0.0
    %v3002 = vsel %vm2282, %v2673, 0.0
    %v3003 = vsel %vm2283, %v2678, 0.0
    %v3004 = vsel %vm2284, %v2683, 0.0
    %v3005 = vsel %vm2269, %v2688, 0.0
    %v3006 = vsel %vm2270, %v2693, 0.0
    %v3007 = vsel %vm2271, %v2698, 0.0
    %v3008 = vsel %vm2272, %v2703, 0.0
    %v3009 = vsel %vm2273, %v2708, 0.0
    %v3010 = vsel %vm2274, %v2713, 0.0
    %v3011 = vsel %vm2275, %v2718, 0.0
    %v3012 = vsel %vm2276, %v2723, 0.0
    %v3013 = vsel %vm2277, %v2728, 0.0
    %v3014 = vsel %vm2278, %v2733, 0.0
    %v3015 = vsel %vm2279, %v2738, 0.0
    %v3016 = vsel %vm2280, %v2743, 0.0
    %v3017 = vsel %vm2281, %v2748, 0.0
    %v3018 = vsel %vm2282, %v2753, 0.0
    %v3019 = vsel %vm2283, %v2758, 0.0
    %v3020 = vsel %vm2284, %v2763, 0.0
    %v3021 = vsel %vm2269, %v2768, 0.0
    %v3022 = vsel %vm2270, %v2773, 0.0
    %v3023 = vsel %vm2271, %v2778, 0.0
    %v3024 = vsel %vm2272, %v2783, 0.0
    %v3025 = vsel %vm2273, %v2788, 0.0
    %v3026 = vsel %vm2274, %v2793, 0.0
    %v3027 = vsel %vm2275, %v2798, 0.0
    %v3028 = vsel %vm2276, %v2803, 0.0
    %v3029 = vsel %vm2277, %v2808, 0.0
    %v3030 = vsel %vm2278, %v2813, 0.0
    %v3031 = vsel %vm2279, %v2818, 0.0
    %v3032 = vsel %vm2280, %v2823, 0.0
    %v3033 = vsel %vm2281, %v2828, 0.0
    %v3034 = vsel %vm2282, %v2833, 0.0
    %v3035 = vsel %vm2283, %v2838, 0.0
    %v3036 = vsel %vm2284, %v2843, 0.0
    %v3037 = vsel %vm2269, %v2848, 0.0
    %v3038 = vsel %vm2270, %v2853, 0.0
    %v3039 = vsel %vm2271, %v2858, 0.0
    %v3040 = vsel %vm2272, %v2863, 0.0
    %v3041 = vsel %vm2273, %v2868, 0.0
    %v3042 = vsel %vm2274, %v2873, 0.0
    %v3043 = vsel %vm2275, %v2878, 0.0
    %v3044 = vsel %vm2276, %v2883, 0.0
    %v3045 = vsel %vm2277, %v2888, 0.0
    %v3046 = vsel %vm2278, %v2893, 0.0
    %v3047 = vsel %vm2279, %v2898, 0.0
    %v3048 = vsel %vm2280, %v2903, 0.0
    %v3049 = vsel %vm2281, %v2908, 0.0
    %v3050 = vsel %vm2282, %v2913, 0.0
    %v3051 = vsel %vm2283, %v2918, 0.0
    %v3052 = vsel %vm2284, %v2923, 0.0
    %v3053 = vadd.f32 %v2925, %v2926
    %v3054 = vadd.f32 %v3053, %v2927
    %v3055 = vadd.f32 %v3054, %v2928
    %v3056 = vadd.f32 %v3055, %v2929
    %v3057 = vadd.f32 %v3056, %v2930
    %v3058 = vadd.f32 %v3057, %v2931
    %v3059 = vadd.f32 %v3058, %v2932
    %v3060 = vadd.f32 %v3059, %v2933
    %v3061 = vadd.f32 %v3060, %v2934
    %v3062 = vadd.f32 %v3061, %v2935
    %v3063 = vadd.f32 %v3062, %v2936
    %v3064 = vadd.f32 %v3063, %v2937
    %v3065 = vadd.f32 %v3064, %v2938
    %v3066 = vadd.f32 %v3065, %v2939
    %v3067 = vadd.f32 %v3066, %v2940
    %v3068 = vrot.slane %v3067, 4
    %v3069 = vadd.f32 %v3067, %v3068
    %v3070 = vrot.slane %v3069, 2
    %v3071 = vadd.f32 %v3069, %v3070
    %v3072 = vrot.slane %v3071, 1
    %v3073 = vadd.f32 %v3071, %v3072
    %v3074 = vadd.f32 %v2941, %v2942
    %v3075 = vadd.f32 %v3074, %v2943
    %v3076 = vadd.f32 %v3075, %v2944
    %v3077 = vadd.f32 %v3076, %v2945
    %v3078 = vadd.f32 %v3077, %v2946
    %v3079 = vadd.f32 %v3078, %v2947
    %v3080 = vadd.f32 %v3079, %v2948
    %v3081 = vadd.f32 %v3080, %v2949
    %v3082 = vadd.f32 %v3081, %v2950
    %v3083 = vadd.f32 %v3082, %v2951
    %v3084 = vadd.f32 %v3083, %v2952
    %v3085 = vadd.f32 %v3084, %v2953
    %v3086 = vadd.f32 %v3085, %v2954
    %v3087 = vadd.f32 %v3086, %v2955
    %v3088 = vadd.f32 %v3087, %v2956
    %v3089 = vrot.slane %v3088, 4
    %v3090 = vadd.f32 %v3088, %v3089
    %v3091 = vrot.slane %v3090, 2
    %v3092 = vadd.f32 %v3090, %v3091
    %v3093 = vrot.slane %v3092, 1
    %v3094 = vadd.f32 %v3092, %v3093
    %v3095 = vadd.f32 %v2957, %v2958
    %v3096 = vadd.f32 %v3095, %v2959
    %v3097 = vadd.f32 %v3096, %v2960
    %v3098 = vadd.f32 %v3097, %v2961
    %v3099 = vadd.f32 %v3098, %v2962
    %v3100 = vadd.f32 %v3099, %v2963
    %v3101 = vadd.f32 %v3100, %v2964
    %v3102 = vadd.f32 %v3101, %v2965
    %v3103 = vadd.f32 %v3102, %v2966
    %v3104 = vadd.f32 %v3103, %v2967
    %v3105 = vadd.f32 %v3104, %v2968
    %v3106 = vadd.f32 %v3105, %v2969
    %v3107 = vadd.f32 %v3106, %v2970
    %v3108 = vadd.f32 %v3107, %v2971
    %v3109 = vadd.f32 %v3108, %v2972
    %v3110 = vrot.slane %v3109, 4
    %v3111 = vadd.f32 %v3109, %v3110
    %v3112 = vrot.slane %v3111, 2
    %v3113 = vadd.f32 %v3111, %v3112
    %v3114 = vrot.slane %v3113, 1
    %v3115 = vadd.f32 %v3113, %v3114
    %v3116 = vadd.f32 %v2973, %v2974
    %v3117 = vadd.f32 %v3116, %v2975
    %v3118 = vadd.f32 %v3117, %v2976
    %v3119 = vadd.f32 %v3118, %v2977
    %v3120 = vadd.f32 %v3119, %v2978
    %v3121 = vadd.f32 %v3120, %v2979
    %v3122 = vadd.f32 %v3121, %v2980
    %v3123 = vadd.f32 %v3122, %v2981
    %v3124 = vadd.f32 %v3123, %v2982
    %v3125 = vadd.f32 %v3124, %v2983
    %v3126 = vadd.f32 %v3125, %v2984
    %v3127 = vadd.f32 %v3126, %v2985
    %v3128 = vadd.f32 %v3127, %v2986
    %v3129 = vadd.f32 %v3128, %v2987
    %v3130 = vadd.f32 %v3129, %v2988
    %v3131 = vrot.slane %v3130, 4
    %v3132 = vadd.f32 %v3130, %v3131
    %v3133 = vrot.slane %v3132, 2
    %v3134 = vadd.f32 %v3132, %v3133
    %v3135 = vrot.slane %v3134, 1
    %v3136 = vadd.f32 %v3134, %v3135
    %v3137 = vadd.f32 %v2989, %v2990
    %v3138 = vadd.f32 %v3137, %v2991
    %v3139 = vadd.f32 %v3138, %v2992
    %v3140 = vadd.f32 %v3139, %v2993
    %v3141 = vadd.f32 %v3140, %v2994
    %v3142 = vadd.f32 %v3141, %v2995
    %v3143 = vadd.f32 %v3142, %v2996
    %v3144 = vadd.f32 %v3143, %v2997
    %v3145 = vadd.f32 %v3144, %v2998
    %v3146 = vadd.f32 %v3145, %v2999
    %v3147 = vadd.f32 %v3146, %v3000
    %v3148 = vadd.f32 %v3147, %v3001
    %v3149 = vadd.f32 %v3148, %v3002
    %v3150 = vadd.f32 %v3149, %v3003
    %v3151 = vadd.f32 %v3150, %v3004
    %v3152 = vrot.slane %v3151, 4
    %v3153 = vadd.f32 %v3151, %v3152
    %v3154 = vrot.slane %v3153, 2
    %v3155 = vadd.f32 %v3153, %v3154
    %v3156 = vrot.slane %v3155, 1
    %v3157 = vadd.f32 %v3155, %v3156
    %v3158 = vadd.f32 %v3005, %v3006
    %v3159 = vadd.f32 %v3158, %v3007
    %v3160 = vadd.f32 %v3159, %v3008
    %v3161 = vadd.f32 %v3160, %v3009
    %v3162 = vadd.f32 %v3161, %v3010
    %v3163 = vadd.f32 %v3162, %v3011
    %v3164 = vadd.f32 %v3163, %v3012
    %v3165 = vadd.f32 %v3164, %v3013
    %v3166 = vadd.f32 %v3165, %v3014
    %v3167 = vadd.f32 %v3166, %v3015
    %v3168 = vadd.f32 %v3167, %v3016
    %v3169 = vadd.f32 %v3168, %v3017
    %v3170 = vadd.f32 %v3169, %v3018
    %v3171 = vadd.f32 %v3170, %v3019
    %v3172 = vadd.f32 %v3171, %v3020
    %v3173 = vrot.slane %v3172, 4
    %v3174 = vadd.f32 %v3172, %v3173
    %v3175 = vrot.slane %v3174, 2
    %v3176 = vadd.f32 %v3174, %v3175
    %v3177 = vrot.slane %v3176, 1
    %v3178 = vadd.f32 %v3176, %v3177
    %v3179 = vadd.f32 %v3021, %v3022
    %v3180 = vadd.f32 %v3179, %v3023
    %v3181 = vadd.f32 %v3180, %v3024
    %v3182 = vadd.f32 %v3181, %v3025
    %v3183 = vadd.f32 %v3182, %v3026
    %v3184 = vadd.f32 %v3183, %v3027
    %v3185 = vadd.f32 %v3184, %v3028
    %v3186 = vadd.f32 %v3185, %v3029
    %v3187 = vadd.f32 %v3186, %v3030
    %v3188 = vadd.f32 %v3187, %v3031
    %v3189 = vadd.f32 %v3188, %v3032
    %v3190 = vadd.f32 %v3189, %v3033
    %v3191 = vadd.f32 %v3190, %v3034
    %v3192 = vadd.f32 %v3191, %v3035
    %v3193 = vadd.f32 %v3192, %v3036
    %v3194 = vrot.slane %v3193, 4
    %v3195 = vadd.f32 %v3193, %v3194
    %v3196 = vrot.slane %v3195, 2
    %v3197 = vadd.f32 %v3195, %v3196
    %v3198 = vrot.slane %v3197, 1
    %v3199 = vadd.f32 %v3197, %v3198
    %v3200 = vadd.f32 %v3037, %v3038
    %v3201 = vadd.f32 %v3200, %v3039
    %v3202 = vadd.f32 %v3201, %v3040
    %v3203 = vadd.f32 %v3202, %v3041
    %v3204 = vadd.f32 %v3203, %v3042
    %v3205 = vadd.f32 %v3204, %v3043
    %v3206 = vadd.f32 %v3205, %v3044
    %v3207 = vadd.f32 %v3206, %v3045
    %v3208 = vadd.f32 %v3207, %v3046
    %v3209 = vadd.f32 %v3208, %v3047
    %v3210 = vadd.f32 %v3209, %v3048
    %v3211 = vadd.f32 %v3210, %v3049
    %v3212 = vadd.f32 %v3211, %v3050
    %v3213 = vadd.f32 %v3212, %v3051
    %v3214 = vadd.f32 %v3213, %v3052
    %v3215 = vrot.slane %v3214, 4
    %v3216 = vadd.f32 %v3214, %v3215
    %v3217 = vrot.slane %v3216, 2
    %v3218 = vadd.f32 %v3216, %v3217
    %v3219 = vrot.slane %v3218, 1
    %v3220 = vadd.f32 %v3218, %v3219
    %v3221 = vld [vmem:[#allocation2] sm:$0x1]
    %v3223 = vperm.slane %v3221, 0
    %3224 = vset.pattern.permute.xlu0 0
    %3225 = vperm.xlu0 %3224, %v3223
    %v3226 = vpop.permute.xlu0 %3225
    %v3228 = vadd.f32 %v3073, %v3226
    %v3229 = vadd.f32 %v3094, %v3226
    %v3230 = vadd.f32 %v3115, %v3226
    %v3231 = vadd.f32 %v3136, %v3226
    %v3232 = vadd.f32 %v3157, %v3226
    %v3233 = vadd.f32 %v3178, %v3226
    %v3234 = vadd.f32 %v3199, %v3226
    %v3235 = vadd.f32 %v3220, %v3226
    %v3236 = vsub.f32 0.0, %v3228
    %v3237 = vsub.f32 0.0, %v3229
    %v3238 = vsub.f32 0.0, %v3230
    %v3239 = vsub.f32 0.0, %v3231
    %v3240 = vsub.f32 0.0, %v3232
    %v3241 = vsub.f32 0.0, %v3233
    %v3242 = vsub.f32 0.0, %v3234
    %v3243 = vsub.f32 0.0, %v3235
    %v3244 = vmul.f32 %v3236, 1.442695
    %v3245 = vpow.pop %v3244
    %v3246 = vmul.f32 %v3237, 1.442695
    %v3247 = vpow.pop %v3246
    %v3248 = vmul.f32 %v3238, 1.442695
    %v3249 = vpow.pop %v3248
    %v3250 = vmul.f32 %v3239, 1.442695
    %v3251 = vpow.pop %v3250
    %v3252 = vmul.f32 %v3240, 1.442695
    %v3253 = vpow.pop %v3252
    %v3254 = vmul.f32 %v3241, 1.442695
    %v3255 = vpow.pop %v3254
    %v3256 = vmul.f32 %v3242, 1.442695
    %v3257 = vpow.pop %v3256
    %v3258 = vmul.f32 %v3243, 1.442695
    %v3259 = vpow.pop %v3258
    %v3260 = vadd.f32 %v3245, 1.0
    %v3261 = vadd.f32 %v3247, 1.0
    %v3262 = vadd.f32 %v3249, 1.0
    %v3263 = vadd.f32 %v3251, 1.0
    %v3264 = vadd.f32 %v3253, 1.0
    %v3265 = vadd.f32 %v3255, 1.0
    %v3266 = vadd.f32 %v3257, 1.0
    %v3267 = vadd.f32 %v3259, 1.0
    %v3268 = vrcp.pop %v3260
    %v3269 = vmul.f32 %v3260, %v3268
    %v3270 = vsub.f32 1.0, %v3269
    %v3271 = vmul.f32 %v3268, %v3270
    %v3272 = vadd.f32 %v3268, %v3271
    %vm3273 = vweird.f32 %v3260
    %vm3274 = vweird.f32 %v3268
    %vm3275 = vmor %vm3273, %vm3274
    %v3276 = vsel %vm3275, %v3268, %v3272
    %v3277 = vand.u32 2147483647, %v3260
    %vm3278 = vcmp.eq.f32.partialorder %v3277, 8.507059e+37
    %v3279 = vand.u32 %v3260, 2147483648
    %v3280 = vor.u32 1.1754944e-38, %v3279
    %v3281 = vsel %vm3278, %v3280, %v3276
    %v3282 = vrcp.pop %v3261
    %v3283 = vmul.f32 %v3261, %v3282
    %v3284 = vsub.f32 1.0, %v3283
    %v3285 = vmul.f32 %v3282, %v3284
    %v3286 = vadd.f32 %v3282, %v3285
    %vm3287 = vweird.f32 %v3261
    %vm3288 = vweird.f32 %v3282
    %vm3289 = vmor %vm3287, %vm3288
    %v3290 = vsel %vm3289, %v3282, %v3286
    %v3291 = vand.u32 2147483647, %v3261
    %vm3292 = vcmp.eq.f32.partialorder %v3291, 8.507059e+37
    %v3293 = vand.u32 %v3261, 2147483648
    %v3294 = vor.u32 1.1754944e-38, %v3293
    %v3295 = vsel %vm3292, %v3294, %v3290
    %v3296 = vrcp.pop %v3262
    %v3297 = vmul.f32 %v3262, %v3296
    %v3298 = vsub.f32 1.0, %v3297
    %v3299 = vmul.f32 %v3296, %v3298
    %v3300 = vadd.f32 %v3296, %v3299
    %vm3301 = vweird.f32 %v3262
    %vm3302 = vweird.f32 %v3296
    %vm3303 = vmor %vm3301, %vm3302
    %v3304 = vsel %vm3303, %v3296, %v3300
    %v3305 = vand.u32 2147483647, %v3262
    %vm3306 = vcmp.eq.f32.partialorder %v3305, 8.507059e+37
    %v3307 = vand.u32 %v3262, 2147483648
    %v3308 = vor.u32 1.1754944e-38, %v3307
    %v3309 = vsel %vm3306, %v3308, %v3304
    %v3310 = vrcp.pop %v3263
    %v3311 = vmul.f32 %v3263, %v3310
    %v3312 = vsub.f32 1.0, %v3311
    %v3313 = vmul.f32 %v3310, %v3312
    %v3314 = vadd.f32 %v3310, %v3313
    %vm3315 = vweird.f32 %v3263
    %vm3316 = vweird.f32 %v3310
    %vm3317 = vmor %vm3315, %vm3316
    %v3318 = vsel %vm3317, %v3310, %v3314
    %v3319 = vand.u32 2147483647, %v3263
    %vm3320 = vcmp.eq.f32.partialorder %v3319, 8.507059e+37
    %v3321 = vand.u32 %v3263, 2147483648
    %v3322 = vor.u32 1.1754944e-38, %v3321
    %v3323 = vsel %vm3320, %v3322, %v3318
    %v3324 = vrcp.pop %v3264
    %v3325 = vmul.f32 %v3264, %v3324
    %v3326 = vsub.f32 1.0, %v3325
    %v3327 = vmul.f32 %v3324, %v3326
    %v3328 = vadd.f32 %v3324, %v3327
    %vm3329 = vweird.f32 %v3264
    %vm3330 = vweird.f32 %v3324
    %vm3331 = vmor %vm3329, %vm3330
    %v3332 = vsel %vm3331, %v3324, %v3328
    %v3333 = vand.u32 2147483647, %v3264
    %vm3334 = vcmp.eq.f32.partialorder %v3333, 8.507059e+37
    %v3335 = vand.u32 %v3264, 2147483648
    %v3336 = vor.u32 1.1754944e-38, %v3335
    %v3337 = vsel %vm3334, %v3336, %v3332
    %v3338 = vrcp.pop %v3265
    %v3339 = vmul.f32 %v3265, %v3338
    %v3340 = vsub.f32 1.0, %v3339
    %v3341 = vmul.f32 %v3338, %v3340
    %v3342 = vadd.f32 %v3338, %v3341
    %vm3343 = vweird.f32 %v3265
    %vm3344 = vweird.f32 %v3338
    %vm3345 = vmor %vm3343, %vm3344
    %v3346 = vsel %vm3345, %v3338, %v3342
    %v3347 = vand.u32 2147483647, %v3265
    %vm3348 = vcmp.eq.f32.partialorder %v3347, 8.507059e+37
    %v3349 = vand.u32 %v3265, 2147483648
    %v3350 = vor.u32 1.1754944e-38, %v3349
    %v3351 = vsel %vm3348, %v3350, %v3346
    %v3352 = vrcp.pop %v3266
    %v3353 = vmul.f32 %v3266, %v3352
    %v3354 = vsub.f32 1.0, %v3353
    %v3355 = vmul.f32 %v3352, %v3354
    %v3356 = vadd.f32 %v3352, %v3355
    %vm3357 = vweird.f32 %v3266
    %vm3358 = vweird.f32 %v3352
    %vm3359 = vmor %vm3357, %vm3358
    %v3360 = vsel %vm3359, %v3352, %v3356
    %v3361 = vand.u32 2147483647, %v3266
    %vm3362 = vcmp.eq.f32.partialorder %v3361, 8.507059e+37
    %v3363 = vand.u32 %v3266, 2147483648
    %v3364 = vor.u32 1.1754944e-38, %v3363
    %v3365 = vsel %vm3362, %v3364, %v3360
    %v3366 = vrcp.pop %v3267
    %v3367 = vmul.f32 %v3267, %v3366
    %v3368 = vsub.f32 1.0, %v3367
    %v3369 = vmul.f32 %v3366, %v3368
    %v3370 = vadd.f32 %v3366, %v3369
    %vm3371 = vweird.f32 %v3267
    %vm3372 = vweird.f32 %v3366
    %vm3373 = vmor %vm3371, %vm3372
    %v3374 = vsel %vm3373, %v3366, %v3370
    %v3375 = vand.u32 2147483647, %v3267
    %vm3376 = vcmp.eq.f32.partialorder %v3375, 8.507059e+37
    %v3377 = vand.u32 %v3267, 2147483648
    %v3378 = vor.u32 1.1754944e-38, %v3377
    %v3379 = vsel %vm3376, %v3378, %v3374
    %vm3388 = vcmask 1041409
    %v3389 = vsel %vm3388, %v3295, %v3281
    %vm3390 = vcmask 1042434
    %v3391 = vsel %vm3390, %v3309, %v3389
    %vm3392 = vcmask 1043459
    %v3393 = vsel %vm3392, %v3323, %v3391
    %vm3394 = vcmask 1044484
    %v3395 = vsel %vm3394, %v3337, %v3393
    %vm3396 = vcmask 1045509
    %v3397 = vsel %vm3396, %v3351, %v3395
    %vm3398 = vcmask 1046534
    %v3399 = vsel %vm3398, %v3365, %v3397
    %vm3400 = vcmask 1047559
    %v3401 = vsel %vm3400, %v3379, %v3399
    %3403 = vst [vmem:[#allocation3] sm:$0xff] %v3401
    // Predicated region
    $region30: #{tpu_custom_call.1} parent=1 // pred_check
      _
    $region31: #{tpu_custom_call.1} parent=1 // pred_check_branch
      %3405 = sbr.rel (0) target = $region33
    $region32: #{tpu_custom_call.1} parent=1 // pred_region
      %3407 = vsyncadd [#allocation4], 96
      %s3408 = sshll.u32 [#allocation3], 4
      %s3409 = int_to_ptr.vmem [resolvable:$true] %s3408
      %s3410 = sshll.u32 %s7, 4
      %s3411 = int_to_ptr.hbm [resolvable:$true] %s3410
      %3416 = dma.vmem_to_hbm [thread:$0]  %s3409, 32, %s3411, [#allocation4], 32, 32, 2
    $region33: #{tpu_custom_call.1} parent=1 // pred_fallthru
      _
    // Predicated region
    $region34: #{tpu_custom_call.1} parent=1 // pred_check
      _
    $region35: #{tpu_custom_call.1} parent=1 // pred_check_branch
      %3418 = sbr.rel (0) target = $region37
    $region36: #{tpu_custom_call.1} parent=1 // pred_region
      %3420 = dma.done [#allocation4], 128
    $region37: #{tpu_custom_call.1} parent=1 // pred_fallthru
      _
    %3421 = vsyncpa [#allocation4], 1

</llo_original>
